<compile_context>
chip_gen: v5e
topology: v5e:2x2
jax: 0.10.0
libtpu: 0.0.40
codegen_flags: <defaults>
</compile_context>

<pallas_src>
import functools

import numpy as np
import jax
import jax.numpy as jnp
from jax import lax
from jax.experimental import pallas as pl
from jax.experimental.pallas import tpu as pltpu


# ----------------------------------------------------------------------------
# In-kernel attention core (per batch-block, all heads)
# ----------------------------------------------------------------------------
def _attention_heads(qkv, *, heads, dim_head):
    """qkv: (Bt, N, 3*H*Dh) in the compute dtype, Q columns already pre-scaled.

    Returns the concatenated-head attention output (Bt, N, H*Dh) in the compute
    dtype.  Softmax statistics are kept in f32."""
    cdt = qkv.dtype
    inner = heads * dim_head
    outs = []
    # Static loop over heads: attention is inherently per-(batch, head); each
    # per-head matmul below still runs with Bt*N rows feeding the MXU.
    for h in range(heads):
        lo = h * dim_head
        q = qkv[:, :, lo:lo + dim_head]                            # (Bt, N, Dh)
        k = qkv[:, :, inner + lo:inner + lo + dim_head]            # (Bt, N, Dh)
        v = qkv[:, :, 2 * inner + lo:2 * inner + lo + dim_head]    # (Bt, N, Dh)

        # QK^T: batched contraction over the Dh dims (no per-head transpose).
        s = lax.dot_general(q, k, (((2,), (2,)), ((0,), (0,))),
                            preferred_element_type=jnp.float32)    # (Bt, N, N)

        # Numerically stable softmax, f32 stats; denominator on the EUP slot.
        s = s - jnp.max(s, axis=-1, keepdims=True)
        p = jnp.exp(s)
        p = p * pl.reciprocal(jnp.sum(p, axis=-1, keepdims=True), approx=True)

        # TODO(synk): nn.Dropout on the attention weights is identity at p=0.0
        # / eval mode, so it is omitted.
        o = lax.dot_general(p.astype(cdt), v, (((2,), (1,)), ((0,), (0,))),
                            preferred_element_type=jnp.float32)    # (Bt, N, Dh)
        outs.append(o.astype(cdt))
    return jnp.concatenate(outs, axis=-1)                          # (Bt, N, H*Dh)


# ----------------------------------------------------------------------------
# Kernels
# ----------------------------------------------------------------------------
def _mha_proj_kernel(x_ref, wqkv_ref, wo_ref, bo_ref, o_ref, *, heads, dim_head):
    bt, n, d = x_ref.shape
    cdt = x_ref.dtype
    x2d = x_ref[...].reshape(bt * n, d)

    # Single fused, lane-dense QKV projection (f32 accumulation on the MXU);
    # cast once to the compute dtype -- no f32 q/k/v copies are kept around.
    qkv = jnp.dot(x2d, wqkv_ref[...],
                  preferred_element_type=jnp.float32).astype(cdt)
    qkv = qkv.reshape(bt, n, 3 * heads * dim_head)

    attn = _attention_heads(qkv, heads=heads, dim_head=dim_head)   # (Bt,N,inner)

    # Output projection: ONE contraction over the full inner (=H*Dh) axis.
    y = jnp.dot(attn.reshape(bt * n, heads * dim_head), wo_ref[...],
                preferred_element_type=jnp.float32)
    y = y + bo_ref[...].astype(jnp.float32)                        # (M, D)
    o_ref[...] = y.reshape(bt, n, d).astype(o_ref.dtype)


def _mha_noproj_kernel(x_ref, wqkv_ref, o_ref, *, heads, dim_head):
    # project_out == False implies heads == 1 and dim_head == dim.
    bt, n, d = x_ref.shape
    cdt = x_ref.dtype
    x2d = x_ref[...].reshape(bt * n, d)
    qkv = jnp.dot(x2d, wqkv_ref[...],
                  preferred_element_type=jnp.float32).astype(cdt)
    qkv = qkv.reshape(bt, n, 3 * heads * dim_head)
    attn = _attention_heads(qkv, heads=heads, dim_head=dim_head)
    o_ref[...] = attn.astype(o_ref.dtype)


# ----------------------------------------------------------------------------
# One-time parameter layout + wrapper
# ----------------------------------------------------------------------------
def prepare_attention_params(w_qkv, w_out=None, b_out=None, *, heads, dim_head):
    """One-time parameter preparation (do NOT call per forward pass).

    w_qkv : [D, 3*heads*dim_head]  (= to_qkv.weight.T, no bias)
    w_out : [heads*dim_head, D]    (= to_out[0].weight.T)  -- if project_out
    b_out : [D]                    (= to_out[0].bias)      -- if project_out
    The 1/sqrt(Dh) softmax scale is folded into the Q columns here.
    """
    d = w_qkv.shape[0]
    inner = heads * dim_head
    scale = float(dim_head) ** -0.5
    wqkv = jnp.concatenate([w_qkv[:, :inner] * scale, w_qkv[:, inner:]], axis=-1)
    project_out = not (heads == 1 and dim_head == d)
    if project_out:
        assert w_out is not None and b_out is not None
        return (wqkv, w_out, b_out.reshape(1, d))
    return (wqkv,)


def _pick_block_b(batch, seq):
    """Largest divisor of `batch` keeping <= 256 projection rows per grid step."""
    best = 1
    for cand in range(1, batch + 1):
        if batch % cand == 0 and cand * seq <= max(256, seq):
            best = cand
    return best


def _vmem_limit_bytes():
    """~3/4 of physical VMEM per generation (96 MiB v5e/v6e, ~48 MiB v7x)."""
    try:
        cap = getattr(pltpu.get_tpu_info(), "vmem_capacity_bytes", None)
        if cap:
            return int(min(cap * 3 // 4, 112 * 1024 * 1024))
    except Exception:
        pass
    return 64 * 1024 * 1024


def multihead_attention(x, params, *, heads, dim_head):
    """Fused forward of the PyTorch `Attention` module (eval mode).

    x      : [B, N, D]
    params : output of `prepare_attention_params` (pre-laid-out weights).
    """
    b, n, d = x.shape
    inner = heads * dim_head
    project_out = not (heads == 1 and dim_head == d)
    if project_out:
        assert len(params) == 3
    else:
        # Explicit invariant (to_out is Identity only for a single full-width head).
        assert heads == 1 and dim_head == d and len(params) == 1

    block_b = _pick_block_b(b, n)
    grid = (b // block_b,)

    # Weights have a constant index_map, so Pallas issues their DMA exactly
    # once across the grid; the default second pipeline buffer for them is
    # simply idle (pl.Buffered(1) would reclaim that copy; kept default here
    # for portability).
    in_specs = [
        pl.BlockSpec((block_b, n, d), lambda i: (i, 0, 0)),
        pl.BlockSpec((d, 3 * inner), lambda i: (0, 0)),
    ]
    if project_out:
        in_specs += [
            pl.BlockSpec((inner, d), lambda i: (0, 0)),
            pl.BlockSpec((1, d), lambda i: (0, 0)),
        ]
        kernel = functools.partial(_mha_proj_kernel, heads=heads,
                                   dim_head=dim_head)
        out_dim = d
    else:
        kernel = functools.partial(_mha_noproj_kernel, heads=heads,
                                   dim_head=dim_head)
        out_dim = inner

    # TODO(synk): the full (block_b, N, N) f32 score tile per head is still
    # materialized; for long sequences (especially v7x's 64 MiB VMEM) add
    # flash-style query/KV blocking with an online softmax.
    return pl.pallas_call(
        kernel,
        out_shape=jax.ShapeDtypeStruct((b, n, out_dim), x.dtype),
        grid=grid,
        in_specs=in_specs,
        out_specs=pl.BlockSpec((block_b, n, out_dim), lambda i: (i, 0, 0)),
        compiler_params=pltpu.CompilerParams(
            dimension_semantics=("parallel",),
            vmem_limit_bytes=_vmem_limit_bytes()),
    )(x, *params)


# ----------------------------------------------------------------------------
# Pure-JAX reference (PyTorch math, eval-mode dropout)
# ----------------------------------------------------------------------------
def attention_reference(x, w_qkv, w_out, b_out, *, heads, dim_head):
    B, N, D = x.shape
    inner = heads * dim_head
    qkv = x @ w_qkv                                  # (B, N, 3*inner)
    q, k, v = jnp.split(qkv, 3, axis=-1)

    def to_heads(t):
        return t.reshape(B, N, heads, dim_head).transpose(0, 2, 1, 3)

    q, k, v = map(to_heads, (q, k, v))
    s = jnp.einsum('bhqd,bhkd->bhqk', q, k) * (float(dim_head) ** -0.5)
    p = jax.nn.softmax(s, axis=-1)
    o = jnp.einsum('bhqk,bhkd->bhqd', p, v)
    o = o.transpose(0, 2, 1, 3).reshape(B, N, inner)
    if not (heads == 1 and dim_head == D):
        o = o @ w_out + b_out
    return o


# ----------------------------------------------------------------------------
if __name__ == "__main__":
    B, N, D = 2, 8, 32                 # small shapes consistent with the module
    heads, dim_head = 8, 64            # nn.Attention defaults -> inner = 512
    inner = heads * dim_head

    key = jax.random.PRNGKey(0)
    kx, kq, kw, kb = jax.random.split(key, 4)
    x = jax.random.normal(kx, (B, N, D), jnp.float32)
    w_qkv = 0.1 * jax.random.normal(kq, (D, 3 * inner), jnp.float32)
    w_out = 0.1 * jax.random.normal(kw, (inner, D), jnp.float32)
    b_out = 0.1 * jax.random.normal(kb, (D,), jnp.float32)

    # One-time weight layout / scale folding (kept out of the jitted forward).
    params = prepare_attention_params(w_qkv, w_out, b_out,
                                      heads=heads, dim_head=dim_head)

    fwd = jax.jit(functools.partial(multihead_attention, heads=heads,
                                    dim_head=dim_head))

    out = fwd(x, params)
    jax.block_until_ready(out)
    assert out.shape == (B, N, D)

    # Correctness against the pure-JAX reference (tolerance covers TPU default
    # bf16-decomposed f32 matmul precision + the approx-reciprocal softmax).
    ref = attention_reference(x, w_qkv, w_out, b_out, heads=heads,
                              dim_head=dim_head)
    np.testing.assert_allclose(np.asarray(out), np.asarray(ref),
                               atol=3e-2, rtol=3e-2)

    # bf16 operands: feeds the MXU at full bf16 rate on v6e/v7x while keeping
    # f32 accumulation and f32 softmax statistics inside the kernel.
    params_bf16 = prepare_attention_params(
        w_qkv.astype(jnp.bfloat16), w_out.astype(jnp.bfloat16),
        b_out.astype(jnp.bfloat16), heads=heads, dim_head=dim_head)
    out_bf16 = fwd(x.astype(jnp.bfloat16), params_bf16)
    jax.block_until_ready(out_bf16)
    assert out_bf16.shape == (B, N, D) and out_bf16.dtype == jnp.bfloat16

    print("KERNEL_OK")
</pallas_src>

<mosaic_0001>
module attributes {stable_mosaic.version = 11 : i64} {
  func.func @_mha_proj_kernel(%arg0: i32, %arg1: memref<2x8x32xf32, #tpu.memory_space<vmem>>, %arg2: memref<32x1536xf32, #tpu.memory_space<vmem>>, %arg3: memref<512x32xf32, #tpu.memory_space<vmem>>, %arg4: memref<1x32xf32, #tpu.memory_space<vmem>>, %arg5: memref<2x8x32xf32, #tpu.memory_space<vmem>>) attributes {dimension_semantics = [#tpu.dimension_semantics<parallel>], iteration_bounds = array<i64: 1>, scalar_prefetch = 0 : i64, scratch_operands = 0 : i64, tpu.core_type = #tpu.core_type<tc>, window_params = [{transform_indices = @transform_0, window_bounds = array<i64: 2, 8, 32>}, {pipeline_mode = #tpu.pipeline_mode<synchronous>, transform_indices = @transform_1, window_bounds = array<i64: 32, 1536>}, {pipeline_mode = #tpu.pipeline_mode<synchronous>, transform_indices = @transform_2, window_bounds = array<i64: 512, 32>}, {pipeline_mode = #tpu.pipeline_mode<synchronous>, transform_indices = @transform_3, window_bounds = array<i64: 1, 32>}, {transform_indices = @transform_4, window_bounds = array<i64: 2, 8, 32>}]} {
    %c0 = arith.constant 0 : index
    %c0_0 = arith.constant 0 : index
    %c0_1 = arith.constant 0 : index
    %0 = vector.load %arg1[%c0, %c0_0, %c0_1] : memref<2x8x32xf32, #tpu.memory_space<vmem>>, vector<2x8x32xf32>
    %1 = vector.shape_cast %0 : vector<2x8x32xf32> to vector<16x32xf32>
    %c0_2 = arith.constant 0 : index
    %c0_3 = arith.constant 0 : index
    %2 = vector.load %arg2[%c0_2, %c0_3] : memref<32x1536xf32, #tpu.memory_space<vmem>>, vector<32x1536xf32>
    %cst = arith.constant dense<0.000000e+00> : vector<16x1536xf32>
    %3 = tpu.matmul %1, %2, %cst {dimension_numbers = #tpu.dot_dimension_numbers<[1], [0], [0], [1], [0, 0, 1, 1], [], []>} : vector<16x32xf32>, vector<32x1536xf32>, vector<16x1536xf32> -> vector<16x1536xf32>
    %4 = vector.shape_cast %3 : vector<16x1536xf32> to vector<2x8x1536xf32>
    %5 = vector.extract_strided_slice %4 {offsets = [0, 0, 0], sizes = [2, 8, 64], strides = [1, 1, 1]} : vector<2x8x1536xf32> to vector<2x8x64xf32>
    %6 = vector.extract_strided_slice %4 {offsets = [0, 0, 512], sizes = [2, 8, 64], strides = [1, 1, 1]} : vector<2x8x1536xf32> to vector<2x8x64xf32>
    %7 = vector.extract_strided_slice %4 {offsets = [0, 0, 1024], sizes = [2, 8, 64], strides = [1, 1, 1]} : vector<2x8x1536xf32> to vector<2x8x64xf32>
    %cst_4 = arith.constant dense<0.000000e+00> : vector<2x8x8xf32>
    %8 = tpu.matmul %5, %6, %cst_4 {dimension_numbers = #tpu.dot_dimension_numbers<[2], [2], [1], [1], [0, 0, 0, 1, 1, 1], [0], [0]>} : vector<2x8x64xf32>, vector<2x8x64xf32>, vector<2x8x8xf32> -> vector<2x8x8xf32>
    %cst_5 = arith.constant dense<0xFF800000> : vector<2x8xf32>
    %9 = vector.multi_reduction <maximumf>, %8, %cst_5 [2] : vector<2x8x8xf32> to vector<2x8xf32>
    %10 = vector.shape_cast %9 : vector<2x8xf32> to vector<2x8x1xf32>
    %11 = vector.broadcast %10 : vector<2x8x1xf32> to vector<2x8x8xf32>
    %12 = arith.subf %8, %11 : vector<2x8x8xf32>
    %13 = math.exp %12 : vector<2x8x8xf32>
    %cst_6 = arith.constant dense<0.000000e+00> : vector<2x8xf32>
    %14 = vector.multi_reduction <add>, %13, %cst_6 [2] : vector<2x8x8xf32> to vector<2x8xf32>
    %15 = vector.shape_cast %14 : vector<2x8xf32> to vector<2x8x1xf32>
    %16 = tpu.reciprocal %15 {approx = true} : vector<2x8x1xf32> -> vector<2x8x1xf32>
    %17 = vector.broadcast %16 : vector<2x8x1xf32> to vector<2x8x8xf32>
    %18 = arith.mulf %13, %17 : vector<2x8x8xf32>
    %cst_7 = arith.constant dense<0.000000e+00> : vector<2x8x64xf32>
    %19 = tpu.matmul %18, %7, %cst_7 {dimension_numbers = #tpu.dot_dimension_numbers<[2], [1], [1], [2], [0, 0, 0, 1, 1, 2], [0], [0]>} : vector<2x8x8xf32>, vector<2x8x64xf32>, vector<2x8x64xf32> -> vector<2x8x64xf32>
    %20 = vector.extract_strided_slice %4 {offsets = [0, 0, 64], sizes = [2, 8, 64], strides = [1, 1, 1]} : vector<2x8x1536xf32> to vector<2x8x64xf32>
    %21 = vector.extract_strided_slice %4 {offsets = [0, 0, 576], sizes = [2, 8, 64], strides = [1, 1, 1]} : vector<2x8x1536xf32> to vector<2x8x64xf32>
    %22 = vector.extract_strided_slice %4 {offsets = [0, 0, 1088], sizes = [2, 8, 64], strides = [1, 1, 1]} : vector<2x8x1536xf32> to vector<2x8x64xf32>
    %cst_8 = arith.constant dense<0.000000e+00> : vector<2x8x8xf32>
    %23 = tpu.matmul %20, %21, %cst_8 {dimension_numbers = #tpu.dot_dimension_numbers<[2], [2], [1], [1], [0, 0, 0, 1, 1, 1], [0], [0]>} : vector<2x8x64xf32>, vector<2x8x64xf32>, vector<2x8x8xf32> -> vector<2x8x8xf32>
    %cst_9 = arith.constant dense<0xFF800000> : vector<2x8xf32>
    %24 = vector.multi_reduction <maximumf>, %23, %cst_9 [2] : vector<2x8x8xf32> to vector<2x8xf32>
    %25 = vector.shape_cast %24 : vector<2x8xf32> to vector<2x8x1xf32>
    %26 = vector.broadcast %25 : vector<2x8x1xf32> to vector<2x8x8xf32>
    %27 = arith.subf %23, %26 : vector<2x8x8xf32>
    %28 = math.exp %27 : vector<2x8x8xf32>
    %cst_10 = arith.constant dense<0.000000e+00> : vector<2x8xf32>
    %29 = vector.multi_reduction <add>, %28, %cst_10 [2] : vector<2x8x8xf32> to vector<2x8xf32>
    %30 = vector.shape_cast %29 : vector<2x8xf32> to vector<2x8x1xf32>
    %31 = tpu.reciprocal %30 {approx = true} : vector<2x8x1xf32> -> vector<2x8x1xf32>
    %32 = vector.broadcast %31 : vector<2x8x1xf32> to vector<2x8x8xf32>
    %33 = arith.mulf %28, %32 : vector<2x8x8xf32>
    %cst_11 = arith.constant dense<0.000000e+00> : vector<2x8x64xf32>
    %34 = tpu.matmul %33, %22, %cst_11 {dimension_numbers = #tpu.dot_dimension_numbers<[2], [1], [1], [2], [0, 0, 0, 1, 1, 2], [0], [0]>} : vector<2x8x8xf32>, vector<2x8x64xf32>, vector<2x8x64xf32> -> vector<2x8x64xf32>
    %35 = vector.extract_strided_slice %4 {offsets = [0, 0, 128], sizes = [2, 8, 64], strides = [1, 1, 1]} : vector<2x8x1536xf32> to vector<2x8x64xf32>
    %36 = vector.extract_strided_slice %4 {offsets = [0, 0, 640], sizes = [2, 8, 64], strides = [1, 1, 1]} : vector<2x8x1536xf32> to vector<2x8x64xf32>
    %37 = vector.extract_strided_slice %4 {offsets = [0, 0, 1152], sizes = [2, 8, 64], strides = [1, 1, 1]} : vector<2x8x1536xf32> to vector<2x8x64xf32>
    %cst_12 = arith.constant dense<0.000000e+00> : vector<2x8x8xf32>
    %38 = tpu.matmul %35, %36, %cst_12 {dimension_numbers = #tpu.dot_dimension_numbers<[2], [2], [1], [1], [0, 0, 0, 1, 1, 1], [0], [0]>} : vector<2x8x64xf32>, vector<2x8x64xf32>, vector<2x8x8xf32> -> vector<2x8x8xf32>
    %cst_13 = arith.constant dense<0xFF800000> : vector<2x8xf32>
    %39 = vector.multi_reduction <maximumf>, %38, %cst_13 [2] : vector<2x8x8xf32> to vector<2x8xf32>
    %40 = vector.shape_cast %39 : vector<2x8xf32> to vector<2x8x1xf32>
    %41 = vector.broadcast %40 : vector<2x8x1xf32> to vector<2x8x8xf32>
    %42 = arith.subf %38, %41 : vector<2x8x8xf32>
    %43 = math.exp %42 : vector<2x8x8xf32>
    %cst_14 = arith.constant dense<0.000000e+00> : vector<2x8xf32>
    %44 = vector.multi_reduction <add>, %43, %cst_14 [2] : vector<2x8x8xf32> to vector<2x8xf32>
    %45 = vector.shape_cast %44 : vector<2x8xf32> to vector<2x8x1xf32>
    %46 = tpu.reciprocal %45 {approx = true} : vector<2x8x1xf32> -> vector<2x8x1xf32>
    %47 = vector.broadcast %46 : vector<2x8x1xf32> to vector<2x8x8xf32>
    %48 = arith.mulf %43, %47 : vector<2x8x8xf32>
    %cst_15 = arith.constant dense<0.000000e+00> : vector<2x8x64xf32>
    %49 = tpu.matmul %48, %37, %cst_15 {dimension_numbers = #tpu.dot_dimension_numbers<[2], [1], [1], [2], [0, 0, 0, 1, 1, 2], [0], [0]>} : vector<2x8x8xf32>, vector<2x8x64xf32>, vector<2x8x64xf32> -> vector<2x8x64xf32>
    %50 = vector.extract_strided_slice %4 {offsets = [0, 0, 192], sizes = [2, 8, 64], strides = [1, 1, 1]} : vector<2x8x1536xf32> to vector<2x8x64xf32>
    %51 = vector.extract_strided_slice %4 {offsets = [0, 0, 704], sizes = [2, 8, 64], strides = [1, 1, 1]} : vector<2x8x1536xf32> to vector<2x8x64xf32>
    %52 = vector.extract_strided_slice %4 {offsets = [0, 0, 1216], sizes = [2, 8, 64], strides = [1, 1, 1]} : vector<2x8x1536xf32> to vector<2x8x64xf32>
    %cst_16 = arith.constant dense<0.000000e+00> : vector<2x8x8xf32>
    %53 = tpu.matmul %50, %51, %cst_16 {dimension_numbers = #tpu.dot_dimension_numbers<[2], [2], [1], [1], [0, 0, 0, 1, 1, 1], [0], [0]>} : vector<2x8x64xf32>, vector<2x8x64xf32>, vector<2x8x8xf32> -> vector<2x8x8xf32>
    %cst_17 = arith.constant dense<0xFF800000> : vector<2x8xf32>
    %54 = vector.multi_reduction <maximumf>, %53, %cst_17 [2] : vector<2x8x8xf32> to vector<2x8xf32>
    %55 = vector.shape_cast %54 : vector<2x8xf32> to vector<2x8x1xf32>
    %56 = vector.broadcast %55 : vector<2x8x1xf32> to vector<2x8x8xf32>
    %57 = arith.subf %53, %56 : vector<2x8x8xf32>
    %58 = math.exp %57 : vector<2x8x8xf32>
    %cst_18 = arith.constant dense<0.000000e+00> : vector<2x8xf32>
    %59 = vector.multi_reduction <add>, %58, %cst_18 [2] : vector<2x8x8xf32> to vector<2x8xf32>
    %60 = vector.shape_cast %59 : vector<2x8xf32> to vector<2x8x1xf32>
    %61 = tpu.reciprocal %60 {approx = true} : vector<2x8x1xf32> -> vector<2x8x1xf32>
    %62 = vector.broadcast %61 : vector<2x8x1xf32> to vector<2x8x8xf32>
    %63 = arith.mulf %58, %62 : vector<2x8x8xf32>
    %cst_19 = arith.constant dense<0.000000e+00> : vector<2x8x64xf32>
    %64 = tpu.matmul %63, %52, %cst_19 {dimension_numbers = #tpu.dot_dimension_numbers<[2], [1], [1], [2], [0, 0, 0, 1, 1, 2], [0], [0]>} : vector<2x8x8xf32>, vector<2x8x64xf32>, vector<2x8x64xf32> -> vector<2x8x64xf32>
    %65 = vector.extract_strided_slice %4 {offsets = [0, 0, 256], sizes = [2, 8, 64], strides = [1, 1, 1]} : vector<2x8x1536xf32> to vector<2x8x64xf32>
    %66 = vector.extract_strided_slice %4 {offsets = [0, 0, 768], sizes = [2, 8, 64], strides = [1, 1, 1]} : vector<2x8x1536xf32> to vector<2x8x64xf32>
    %67 = vector.extract_strided_slice %4 {offsets = [0, 0, 1280], sizes = [2, 8, 64], strides = [1, 1, 1]} : vector<2x8x1536xf32> to vector<2x8x64xf32>
    %cst_20 = arith.constant dense<0.000000e+00> : vector<2x8x8xf32>
    %68 = tpu.matmul %65, %66, %cst_20 {dimension_numbers = #tpu.dot_dimension_numbers<[2], [2], [1], [1], [0, 0, 0, 1, 1, 1], [0], [0]>} : vector<2x8x64xf32>, vector<2x8x64xf32>, vector<2x8x8xf32> -> vector<2x8x8xf32>
    %cst_21 = arith.constant dense<0xFF800000> : vector<2x8xf32>
    %69 = vector.multi_reduction <maximumf>, %68, %cst_21 [2] : vector<2x8x8xf32> to vector<2x8xf32>
    %70 = vector.shape_cast %69 : vector<2x8xf32> to vector<2x8x1xf32>
    %71 = vector.broadcast %70 : vector<2x8x1xf32> to vector<2x8x8xf32>
    %72 = arith.subf %68, %71 : vector<2x8x8xf32>
    %73 = math.exp %72 : vector<2x8x8xf32>
    %cst_22 = arith.constant dense<0.000000e+00> : vector<2x8xf32>
    %74 = vector.multi_reduction <add>, %73, %cst_22 [2] : vector<2x8x8xf32> to vector<2x8xf32>
    %75 = vector.shape_cast %74 : vector<2x8xf32> to vector<2x8x1xf32>
    %76 = tpu.reciprocal %75 {approx = true} : vector<2x8x1xf32> -> vector<2x8x1xf32>
    %77 = vector.broadcast %76 : vector<2x8x1xf32> to vector<2x8x8xf32>
    %78 = arith.mulf %73, %77 : vector<2x8x8xf32>
    %cst_23 = arith.constant dense<0.000000e+00> : vector<2x8x64xf32>
    %79 = tpu.matmul %78, %67, %cst_23 {dimension_numbers = #tpu.dot_dimension_numbers<[2], [1], [1], [2], [0, 0, 0, 1, 1, 2], [0], [0]>} : vector<2x8x8xf32>, vector<2x8x64xf32>, vector<2x8x64xf32> -> vector<2x8x64xf32>
    %80 = vector.extract_strided_slice %4 {offsets = [0, 0, 320], sizes = [2, 8, 64], strides = [1, 1, 1]} : vector<2x8x1536xf32> to vector<2x8x64xf32>
    %81 = vector.extract_strided_slice %4 {offsets = [0, 0, 832], sizes = [2, 8, 64], strides = [1, 1, 1]} : vector<2x8x1536xf32> to vector<2x8x64xf32>
    %82 = vector.extract_strided_slice %4 {offsets = [0, 0, 1344], sizes = [2, 8, 64], strides = [1, 1, 1]} : vector<2x8x1536xf32> to vector<2x8x64xf32>
    %cst_24 = arith.constant dense<0.000000e+00> : vector<2x8x8xf32>
    %83 = tpu.matmul %80, %81, %cst_24 {dimension_numbers = #tpu.dot_dimension_numbers<[2], [2], [1], [1], [0, 0, 0, 1, 1, 1], [0], [0]>} : vector<2x8x64xf32>, vector<2x8x64xf32>, vector<2x8x8xf32> -> vector<2x8x8xf32>
    %cst_25 = arith.constant dense<0xFF800000> : vector<2x8xf32>
    %84 = vector.multi_reduction <maximumf>, %83, %cst_25 [2] : vector<2x8x8xf32> to vector<2x8xf32>
    %85 = vector.shape_cast %84 : vector<2x8xf32> to vector<2x8x1xf32>
    %86 = vector.broadcast %85 : vector<2x8x1xf32> to vector<2x8x8xf32>
    %87 = arith.subf %83, %86 : vector<2x8x8xf32>
    %88 = math.exp %87 : vector<2x8x8xf32>
    %cst_26 = arith.constant dense<0.000000e+00> : vector<2x8xf32>
    %89 = vector.multi_reduction <add>, %88, %cst_26 [2] : vector<2x8x8xf32> to vector<2x8xf32>
    %90 = vector.shape_cast %89 : vector<2x8xf32> to vector<2x8x1xf32>
    %91 = tpu.reciprocal %90 {approx = true} : vector<2x8x1xf32> -> vector<2x8x1xf32>
    %92 = vector.broadcast %91 : vector<2x8x1xf32> to vector<2x8x8xf32>
    %93 = arith.mulf %88, %92 : vector<2x8x8xf32>
    %cst_27 = arith.constant dense<0.000000e+00> : vector<2x8x64xf32>
    %94 = tpu.matmul %93, %82, %cst_27 {dimension_numbers = #tpu.dot_dimension_numbers<[2], [1], [1], [2], [0, 0, 0, 1, 1, 2], [0], [0]>} : vector<2x8x8xf32>, vector<2x8x64xf32>, vector<2x8x64xf32> -> vector<2x8x64xf32>
    %95 = vector.extract_strided_slice %4 {offsets = [0, 0, 384], sizes = [2, 8, 64], strides = [1, 1, 1]} : vector<2x8x1536xf32> to vector<2x8x64xf32>
    %96 = vector.extract_strided_slice %4 {offsets = [0, 0, 896], sizes = [2, 8, 64], strides = [1, 1, 1]} : vector<2x8x1536xf32> to vector<2x8x64xf32>
    %97 = vector.extract_strided_slice %4 {offsets = [0, 0, 1408], sizes = [2, 8, 64], strides = [1, 1, 1]} : vector<2x8x1536xf32> to vector<2x8x64xf32>
    %cst_28 = arith.constant dense<0.000000e+00> : vector<2x8x8xf32>
    %98 = tpu.matmul %95, %96, %cst_28 {dimension_numbers = #tpu.dot_dimension_numbers<[2], [2], [1], [1], [0, 0, 0, 1, 1, 1], [0], [0]>} : vector<2x8x64xf32>, vector<2x8x64xf32>, vector<2x8x8xf32> -> vector<2x8x8xf32>
    %cst_29 = arith.constant dense<0xFF800000> : vector<2x8xf32>
    %99 = vector.multi_reduction <maximumf>, %98, %cst_29 [2] : vector<2x8x8xf32> to vector<2x8xf32>
    %100 = vector.shape_cast %99 : vector<2x8xf32> to vector<2x8x1xf32>
    %101 = vector.broadcast %100 : vector<2x8x1xf32> to vector<2x8x8xf32>
    %102 = arith.subf %98, %101 : vector<2x8x8xf32>
    %103 = math.exp %102 : vector<2x8x8xf32>
    %cst_30 = arith.constant dense<0.000000e+00> : vector<2x8xf32>
    %104 = vector.multi_reduction <add>, %103, %cst_30 [2] : vector<2x8x8xf32> to vector<2x8xf32>
    %105 = vector.shape_cast %104 : vector<2x8xf32> to vector<2x8x1xf32>
    %106 = tpu.reciprocal %105 {approx = true} : vector<2x8x1xf32> -> vector<2x8x1xf32>
    %107 = vector.broadcast %106 : vector<2x8x1xf32> to vector<2x8x8xf32>
    %108 = arith.mulf %103, %107 : vector<2x8x8xf32>
    %cst_31 = arith.constant dense<0.000000e+00> : vector<2x8x64xf32>
    %109 = tpu.matmul %108, %97, %cst_31 {dimension_numbers = #tpu.dot_dimension_numbers<[2], [1], [1], [2], [0, 0, 0, 1, 1, 2], [0], [0]>} : vector<2x8x8xf32>, vector<2x8x64xf32>, vector<2x8x64xf32> -> vector<2x8x64xf32>
    %110 = vector.extract_strided_slice %4 {offsets = [0, 0, 448], sizes = [2, 8, 64], strides = [1, 1, 1]} : vector<2x8x1536xf32> to vector<2x8x64xf32>
    %111 = vector.extract_strided_slice %4 {offsets = [0, 0, 960], sizes = [2, 8, 64], strides = [1, 1, 1]} : vector<2x8x1536xf32> to vector<2x8x64xf32>
    %112 = vector.extract_strided_slice %4 {offsets = [0, 0, 1472], sizes = [2, 8, 64], strides = [1, 1, 1]} : vector<2x8x1536xf32> to vector<2x8x64xf32>
    %cst_32 = arith.constant dense<0.000000e+00> : vector<2x8x8xf32>
    %113 = tpu.matmul %110, %111, %cst_32 {dimension_numbers = #tpu.dot_dimension_numbers<[2], [2], [1], [1], [0, 0, 0, 1, 1, 1], [0], [0]>} : vector<2x8x64xf32>, vector<2x8x64xf32>, vector<2x8x8xf32> -> vector<2x8x8xf32>
    %cst_33 = arith.constant dense<0xFF800000> : vector<2x8xf32>
    %114 = vector.multi_reduction <maximumf>, %113, %cst_33 [2] : vector<2x8x8xf32> to vector<2x8xf32>
    %115 = vector.shape_cast %114 : vector<2x8xf32> to vector<2x8x1xf32>
    %116 = vector.broadcast %115 : vector<2x8x1xf32> to vector<2x8x8xf32>
    %117 = arith.subf %113, %116 : vector<2x8x8xf32>
    %118 = math.exp %117 : vector<2x8x8xf32>
    %cst_34 = arith.constant dense<0.000000e+00> : vector<2x8xf32>
    %119 = vector.multi_reduction <add>, %118, %cst_34 [2] : vector<2x8x8xf32> to vector<2x8xf32>
    %120 = vector.shape_cast %119 : vector<2x8xf32> to vector<2x8x1xf32>
    %121 = tpu.reciprocal %120 {approx = true} : vector<2x8x1xf32> -> vector<2x8x1xf32>
    %122 = vector.broadcast %121 : vector<2x8x1xf32> to vector<2x8x8xf32>
    %123 = arith.mulf %118, %122 : vector<2x8x8xf32>
    %cst_35 = arith.constant dense<0.000000e+00> : vector<2x8x64xf32>
    %124 = tpu.matmul %123, %112, %cst_35 {dimension_numbers = #tpu.dot_dimension_numbers<[2], [1], [1], [2], [0, 0, 0, 1, 1, 2], [0], [0]>} : vector<2x8x8xf32>, vector<2x8x64xf32>, vector<2x8x64xf32> -> vector<2x8x64xf32>
    %125 = tpu.concatenate %19, %34, %49, %64, %79, %94, %109, %124 in 2 : vector<2x8x64xf32>, vector<2x8x64xf32>, vector<2x8x64xf32>, vector<2x8x64xf32>, vector<2x8x64xf32>, vector<2x8x64xf32>, vector<2x8x64xf32>, vector<2x8x64xf32> -> vector<2x8x512xf32>
    %126 = vector.shape_cast %125 : vector<2x8x512xf32> to vector<16x512xf32>
    %c0_36 = arith.constant 0 : index
    %c0_37 = arith.constant 0 : index
    %127 = vector.load %arg3[%c0_36, %c0_37] : memref<512x32xf32, #tpu.memory_space<vmem>>, vector<512x32xf32>
    %cst_38 = arith.constant dense<0.000000e+00> : vector<16x32xf32>
    %128 = tpu.matmul %126, %127, %cst_38 {dimension_numbers = #tpu.dot_dimension_numbers<[1], [0], [0], [1], [0, 0, 1, 1], [], []>} : vector<16x512xf32>, vector<512x32xf32>, vector<16x32xf32> -> vector<16x32xf32>
    %c0_39 = arith.constant 0 : index
    %c0_40 = arith.constant 0 : index
    %129 = vector.load %arg4[%c0_39, %c0_40] : memref<1x32xf32, #tpu.memory_space<vmem>>, vector<1x32xf32>
    %130 = vector.broadcast %129 : vector<1x32xf32> to vector<16x32xf32>
    %131 = arith.addf %128, %130 : vector<16x32xf32>
    %132 = vector.shape_cast %131 : vector<16x32xf32> to vector<2x8x32xf32>
    %c0_41 = arith.constant 0 : index
    %c0_42 = arith.constant 0 : index
    %c0_43 = arith.constant 0 : index
    %133 = vector.load %arg5[%c0_41, %c0_42, %c0_43] : memref<2x8x32xf32, #tpu.memory_space<vmem>>, vector<2x8x32xf32>
    tpu.vector_store %arg5[%c0_41, %c0_42, %c0_43], %132 {strides = array<i32>} : memref<2x8x32xf32, #tpu.memory_space<vmem>>, vector<2x8x32xf32>,
    return
  }
  func.func @transform_0(%arg0: i32) -> (i32, i32, i32) {
    %c0_i32 = arith.constant 0 : i32
    %c0_i32_0 = arith.constant 0 : i32
    %c0_i32_1 = arith.constant 0 : i32
    return %arg0, %c0_i32, %c0_i32_0 : i32, i32, i32
  }
  func.func @transform_1(%arg0: i32) -> (i32, i32) {
    %c0_i32 = arith.constant 0 : i32
    %c0_i32_0 = arith.constant 0 : i32
    %c0_i32_1 = arith.constant 0 : i32
    return %c0_i32, %c0_i32_0 : i32, i32
  }
  func.func @transform_2(%arg0: i32) -> (i32, i32) {
    %c0_i32 = arith.constant 0 : i32
    %c0_i32_0 = arith.constant 0 : i32
    %c0_i32_1 = arith.constant 0 : i32
    return %c0_i32, %c0_i32_0 : i32, i32
  }
  func.func @transform_3(%arg0: i32) -> (i32, i32) {
    %c0_i32 = arith.constant 0 : i32
    %c0_i32_0 = arith.constant 0 : i32
    %c0_i32_1 = arith.constant 0 : i32
    return %c0_i32, %c0_i32_0 : i32, i32
  }
  func.func @transform_4(%arg0: i32) -> (i32, i32, i32) {
    %c0_i32 = arith.constant 0 : i32
    %c0_i32_0 = arith.constant 0 : i32
    %c0_i32_1 = arith.constant 0 : i32
    return %arg0, %c0_i32, %c0_i32_0 : i32, i32, i32
  }
}

</mosaic_0001>

<llo_original>
// kernel: multihead_attention.1
$region0: #{multihead_attention.1}
  #allocation0 [shape = 'u32[]', space=smem, size = 0x4, offset = 0x4, fixed_abs, tag = 'smem constant byte address 0x4 - core index']
  #allocation1 [shape = 'u32[72,128]{1,0:T(1,128)}', space=vmem, size = 0x9000, scoped, tag = 'internal scratch']
  %s0 = inlined_call_operand.vmem [shape: f32[2,8,32], index: 0, kind: input, shape index: {}]
  %s1 = inlined_call_operand.vmem [shape: f32[32,1536], index: 1, kind: input, shape index: {}]
  %s2 = inlined_call_operand.vmem [shape: f32[512,32], index: 2, kind: input, shape index: {}]
  %s3 = inlined_call_operand.vmem [shape: f32[1,32], index: 3, kind: input, shape index: {}]
  %s4 = inlined_call_operand.hbm [shape: f32[2,8,32], index: 4, kind: output, shape index: {}]
  %s5 = sld [smem:[#allocation0]]
  $region26: #{multihead_attention.1} parent=0
    _
  %s7 = ssub.s32 1, %s5
  %s8 = scalar_select 0, %s7, %s5
  $region1: #{multihead_attention.1} parent=0
    #allocation2 [shape = 'u8[8192]{0}', space=vmem, size = 0x2000, scoped, tag = 'output window, operand 0, single buffered']
    #allocation3 [shape = 's32[1]{0}', space=sflag, size = 0x4, scoped, tag = 'scoped memory for multihead_attention.1']
    %9 = vsyncpa [#allocation3], 0
    // Predicated region
    $region2: #{multihead_attention.1} parent=1 // pred_check
      _
    $region3: #{multihead_attention.1} parent=1 // pred_check_branch
      %11 = sbr.rel (0) target = $region5
    $region4: #{multihead_attention.1} parent=1 // pred_region
      _
    $region5: #{multihead_attention.1} parent=1 // pred_fallthru
      _
    // Predicated region
    $region6: #{multihead_attention.1} parent=1 // pred_check
      _
    $region7: #{multihead_attention.1} parent=1 // pred_check_branch
      %13 = sbr.rel (0) target = $region9
    $region8: #{multihead_attention.1} parent=1 // pred_region
      _
    $region9: #{multihead_attention.1} parent=1 // pred_fallthru
      _
    // Predicated region
    $region10: #{multihead_attention.1} parent=1 // pred_check
      _
    $region11: #{multihead_attention.1} parent=1 // pred_check_branch
      %15 = sbr.rel (0) target = $region13
    $region12: #{multihead_attention.1} parent=1 // pred_region
      _
    $region13: #{multihead_attention.1} parent=1 // pred_fallthru
      _
    // Predicated region
    $region14: #{multihead_attention.1} parent=1 // pred_check
      _
    $region15: #{multihead_attention.1} parent=1 // pred_check_branch
      %17 = sbr.rel (0) target = $region17
    $region16: #{multihead_attention.1} parent=1 // pred_region
      _
    $region17: #{multihead_attention.1} parent=1 // pred_fallthru
      _
    %v18 = vld [vmem:[%s0] sm:$0xff]
    %v19 = vld [vmem:[%s0 + $0x8] sm:$0xff]
    %v20 = vld [vmem:[%s1] sm:$0xff]
    %v21 = vld [vmem:[%s1 + $0x8] sm:$0xff]
    %v22 = vld [vmem:[%s1 + $0x10] sm:$0xff]
    %v23 = vld [vmem:[%s1 + $0x18] sm:$0xff]
    %v24 = vld [vmem:[%s1 + $0x20] sm:$0xff]
    %v25 = vld [vmem:[%s1 + $0x28] sm:$0xff]
    %v26 = vld [vmem:[%s1 + $0x30] sm:$0xff]
    %v27 = vld [vmem:[%s1 + $0x38] sm:$0xff]
    %v28 = vld [vmem:[%s1 + $0x40] sm:$0xff]
    %v29 = vld [vmem:[%s1 + $0x48] sm:$0xff]
    %v30 = vld [vmem:[%s1 + $0x50] sm:$0xff]
    %v31 = vld [vmem:[%s1 + $0x58] sm:$0xff]
    %v32 = vld [vmem:[%s1 + $0x60] sm:$0xff]
    %v33 = vld [vmem:[%s1 + $0x68] sm:$0xff]
    %v34 = vld [vmem:[%s1 + $0x70] sm:$0xff]
    %v35 = vld [vmem:[%s1 + $0x78] sm:$0xff]
    %v36 = vld [vmem:[%s1 + $0x80] sm:$0xff]
    %v37 = vld [vmem:[%s1 + $0x88] sm:$0xff]
    %v38 = vld [vmem:[%s1 + $0x90] sm:$0xff]
    %v39 = vld [vmem:[%s1 + $0x98] sm:$0xff]
    %v40 = vld [vmem:[%s1 + $0xa0] sm:$0xff]
    %v41 = vld [vmem:[%s1 + $0xa8] sm:$0xff]
    %v42 = vld [vmem:[%s1 + $0xb0] sm:$0xff]
    %v43 = vld [vmem:[%s1 + $0xb8] sm:$0xff]
    %v44 = vld [vmem:[%s1 + $0xc0] sm:$0xff]
    %v45 = vld [vmem:[%s1 + $0xc8] sm:$0xff]
    %v46 = vld [vmem:[%s1 + $0xd0] sm:$0xff]
    %v47 = vld [vmem:[%s1 + $0xd8] sm:$0xff]
    %v48 = vld [vmem:[%s1 + $0xe0] sm:$0xff]
    %v49 = vld [vmem:[%s1 + $0xe8] sm:$0xff]
    %v50 = vld [vmem:[%s1 + $0xf0] sm:$0xff]
    %v51 = vld [vmem:[%s1 + $0xf8] sm:$0xff]
    %v52 = vld [vmem:[%s1 + $0x100] sm:$0xff]
    %v53 = vld [vmem:[%s1 + $0x108] sm:$0xff]
    %v54 = vld [vmem:[%s1 + $0x110] sm:$0xff]
    %v55 = vld [vmem:[%s1 + $0x118] sm:$0xff]
    %v56 = vld [vmem:[%s1 + $0x120] sm:$0xff]
    %v57 = vld [vmem:[%s1 + $0x128] sm:$0xff]
    %v58 = vld [vmem:[%s1 + $0x130] sm:$0xff]
    %v59 = vld [vmem:[%s1 + $0x138] sm:$0xff]
    %v60 = vld [vmem:[%s1 + $0x140] sm:$0xff]
    %v61 = vld [vmem:[%s1 + $0x148] sm:$0xff]
    %v62 = vld [vmem:[%s1 + $0x150] sm:$0xff]
    %v63 = vld [vmem:[%s1 + $0x158] sm:$0xff]
    %v64 = vld [vmem:[%s1 + $0x160] sm:$0xff]
    %v65 = vld [vmem:[%s1 + $0x168] sm:$0xff]
    %v66 = vld [vmem:[%s1 + $0x170] sm:$0xff]
    %v67 = vld [vmem:[%s1 + $0x178] sm:$0xff]
    %vm68 = vcmask 261120
    %v70 = vsel %vm68, %v18, 0
    %v73 = vsel %vm68, %v19, 0
    %75 = vmatpush.msra.mxu0 0.0
    %76 = vmatpush.msra.mxu0 0.0
    %77 = vmatpush.msra.mxu0 0.0
    %78 = vmatpush.msra.mxu0 0.0
    %79 = vmatpush.msra.mxu0 0.0
    %80 = vmatpush.msra.mxu0 0.0
    %81 = vmatpush.msra.mxu0 0.0
    %82 = vmatpush.msra.mxu0 0.0
    %83 = vmatpush.msra.mxu0 0.0
    %84 = vmatpush.msra.mxu0 0.0
    %85 = vmatpush.msra.mxu0 0.0
    %86 = vmatpush.msra.mxu0 0.0
    %87 = vmatpush.msra.mxu0 %v56
    %88 = vmatpush.msra.mxu0 %v44
    %89 = vmatpush.msra.mxu0 %v32
    %90 = vmatpush.msra.mxu0 %v20
    %91 = vmatmul.f32.gmra.mxu0 %v70
    %v92 = vpop.f32.mrf.mxu0
    %v93 = vadd.f32 0.0, %v92
    %94 = vmatmul.f32.gmra.mxu0 %v73
    %v95 = vpop.f32.mrf.mxu0
    %v96 = vadd.f32 0.0, %v95
    %97 = vdwg.mxu0
    %98 = vmatpush.msra.mxu0 0.0
    %99 = vmatpush.msra.mxu0 0.0
    %100 = vmatpush.msra.mxu0 0.0
    %101 = vmatpush.msra.mxu0 0.0
    %102 = vmatpush.msra.mxu0 0.0
    %103 = vmatpush.msra.mxu0 0.0
    %104 = vmatpush.msra.mxu0 0.0
    %105 = vmatpush.msra.mxu0 0.0
    %106 = vmatpush.msra.mxu0 0.0
    %107 = vmatpush.msra.mxu0 0.0
    %108 = vmatpush.msra.mxu0 0.0
    %109 = vmatpush.msra.mxu0 0.0
    %110 = vmatpush.msra.mxu0 %v57
    %111 = vmatpush.msra.mxu0 %v45
    %112 = vmatpush.msra.mxu0 %v33
    %113 = vmatpush.msra.mxu0 %v21
    %114 = vmatmul.f32.gmra.mxu0 %v70
    %v115 = vpop.f32.mrf.mxu0
    %v116 = vadd.f32 0.0, %v115
    %117 = vmatmul.f32.gmra.mxu0 %v73
    %v118 = vpop.f32.mrf.mxu0
    %v119 = vadd.f32 0.0, %v118
    %120 = vdwg.mxu0
    %121 = vmatpush.msra.mxu0 0.0
    %122 = vmatpush.msra.mxu0 0.0
    %123 = vmatpush.msra.mxu0 0.0
    %124 = vmatpush.msra.mxu0 0.0
    %125 = vmatpush.msra.mxu0 0.0
    %126 = vmatpush.msra.mxu0 0.0
    %127 = vmatpush.msra.mxu0 0.0
    %128 = vmatpush.msra.mxu0 0.0
    %129 = vmatpush.msra.mxu0 0.0
    %130 = vmatpush.msra.mxu0 0.0
    %131 = vmatpush.msra.mxu0 0.0
    %132 = vmatpush.msra.mxu0 0.0
    %133 = vmatpush.msra.mxu0 %v58
    %134 = vmatpush.msra.mxu0 %v46
    %135 = vmatpush.msra.mxu0 %v34
    %136 = vmatpush.msra.mxu0 %v22
    %137 = vmatmul.f32.gmra.mxu0 %v70
    %v138 = vpop.f32.mrf.mxu0
    %v139 = vadd.f32 0.0, %v138
    %140 = vmatmul.f32.gmra.mxu0 %v73
    %v141 = vpop.f32.mrf.mxu0
    %v142 = vadd.f32 0.0, %v141
    %143 = vdwg.mxu0
    %144 = vmatpush.msra.mxu0 0.0
    %145 = vmatpush.msra.mxu0 0.0
    %146 = vmatpush.msra.mxu0 0.0
    %147 = vmatpush.msra.mxu0 0.0
    %148 = vmatpush.msra.mxu0 0.0
    %149 = vmatpush.msra.mxu0 0.0
    %150 = vmatpush.msra.mxu0 0.0
    %151 = vmatpush.msra.mxu0 0.0
    %152 = vmatpush.msra.mxu0 0.0
    %153 = vmatpush.msra.mxu0 0.0
    %154 = vmatpush.msra.mxu0 0.0
    %155 = vmatpush.msra.mxu0 0.0
    %156 = vmatpush.msra.mxu0 %v59
    %157 = vmatpush.msra.mxu0 %v47
    %158 = vmatpush.msra.mxu0 %v35
    %159 = vmatpush.msra.mxu0 %v23
    %160 = vmatmul.f32.gmra.mxu0 %v70
    %v161 = vpop.f32.mrf.mxu0
    %v162 = vadd.f32 0.0, %v161
    %163 = vmatmul.f32.gmra.mxu0 %v73
    %v164 = vpop.f32.mrf.mxu0
    %v165 = vadd.f32 0.0, %v164
    %166 = vdwg.mxu0
    %167 = vmatpush.msra.mxu0 0.0
    %168 = vmatpush.msra.mxu0 0.0
    %169 = vmatpush.msra.mxu0 0.0
    %170 = vmatpush.msra.mxu0 0.0
    %171 = vmatpush.msra.mxu0 0.0
    %172 = vmatpush.msra.mxu0 0.0
    %173 = vmatpush.msra.mxu0 0.0
    %174 = vmatpush.msra.mxu0 0.0
    %175 = vmatpush.msra.mxu0 0.0
    %176 = vmatpush.msra.mxu0 0.0
    %177 = vmatpush.msra.mxu0 0.0
    %178 = vmatpush.msra.mxu0 0.0
    %179 = vmatpush.msra.mxu0 %v60
    %180 = vmatpush.msra.mxu0 %v48
    %181 = vmatpush.msra.mxu0 %v36
    %182 = vmatpush.msra.mxu0 %v24
    %183 = vmatmul.f32.gmra.mxu0 %v70
    %v184 = vpop.f32.mrf.mxu0
    %v185 = vadd.f32 0.0, %v184
    %186 = vmatmul.f32.gmra.mxu0 %v73
    %v187 = vpop.f32.mrf.mxu0
    %v188 = vadd.f32 0.0, %v187
    %189 = vdwg.mxu0
    %190 = vmatpush.msra.mxu0 0.0
    %191 = vmatpush.msra.mxu0 0.0
    %192 = vmatpush.msra.mxu0 0.0
    %193 = vmatpush.msra.mxu0 0.0
    %194 = vmatpush.msra.mxu0 0.0
    %195 = vmatpush.msra.mxu0 0.0
    %196 = vmatpush.msra.mxu0 0.0
    %197 = vmatpush.msra.mxu0 0.0
    %198 = vmatpush.msra.mxu0 0.0
    %199 = vmatpush.msra.mxu0 0.0
    %200 = vmatpush.msra.mxu0 0.0
    %201 = vmatpush.msra.mxu0 0.0
    %202 = vmatpush.msra.mxu0 %v61
    %203 = vmatpush.msra.mxu0 %v49
    %204 = vmatpush.msra.mxu0 %v37
    %205 = vmatpush.msra.mxu0 %v25
    %206 = vmatmul.f32.gmra.mxu0 %v70
    %v207 = vpop.f32.mrf.mxu0
    %v208 = vadd.f32 0.0, %v207
    %209 = vmatmul.f32.gmra.mxu0 %v73
    %v210 = vpop.f32.mrf.mxu0
    %v211 = vadd.f32 0.0, %v210
    %212 = vdwg.mxu0
    %213 = vmatpush.msra.mxu0 0.0
    %214 = vmatpush.msra.mxu0 0.0
    %215 = vmatpush.msra.mxu0 0.0
    %216 = vmatpush.msra.mxu0 0.0
    %217 = vmatpush.msra.mxu0 0.0
    %218 = vmatpush.msra.mxu0 0.0
    %219 = vmatpush.msra.mxu0 0.0
    %220 = vmatpush.msra.mxu0 0.0
    %221 = vmatpush.msra.mxu0 0.0
    %222 = vmatpush.msra.mxu0 0.0
    %223 = vmatpush.msra.mxu0 0.0
    %224 = vmatpush.msra.mxu0 0.0
    %225 = vmatpush.msra.mxu0 %v62
    %226 = vmatpush.msra.mxu0 %v50
    %227 = vmatpush.msra.mxu0 %v38
    %228 = vmatpush.msra.mxu0 %v26
    %229 = vmatmul.f32.gmra.mxu0 %v70
    %v230 = vpop.f32.mrf.mxu0
    %v231 = vadd.f32 0.0, %v230
    %232 = vmatmul.f32.gmra.mxu0 %v73
    %v233 = vpop.f32.mrf.mxu0
    %v234 = vadd.f32 0.0, %v233
    %235 = vdwg.mxu0
    %236 = vmatpush.msra.mxu0 0.0
    %237 = vmatpush.msra.mxu0 0.0
    %238 = vmatpush.msra.mxu0 0.0
    %239 = vmatpush.msra.mxu0 0.0
    %240 = vmatpush.msra.mxu0 0.0
    %241 = vmatpush.msra.mxu0 0.0
    %242 = vmatpush.msra.mxu0 0.0
    %243 = vmatpush.msra.mxu0 0.0
    %244 = vmatpush.msra.mxu0 0.0
    %245 = vmatpush.msra.mxu0 0.0
    %246 = vmatpush.msra.mxu0 0.0
    %247 = vmatpush.msra.mxu0 0.0
    %248 = vmatpush.msra.mxu0 %v63
    %249 = vmatpush.msra.mxu0 %v51
    %250 = vmatpush.msra.mxu0 %v39
    %251 = vmatpush.msra.mxu0 %v27
    %252 = vmatmul.f32.gmra.mxu0 %v70
    %v253 = vpop.f32.mrf.mxu0
    %v254 = vadd.f32 0.0, %v253
    %255 = vmatmul.f32.gmra.mxu0 %v73
    %v256 = vpop.f32.mrf.mxu0
    %v257 = vadd.f32 0.0, %v256
    %258 = vdwg.mxu0
    %259 = vmatpush.msra.mxu0 0.0
    %260 = vmatpush.msra.mxu0 0.0
    %261 = vmatpush.msra.mxu0 0.0
    %262 = vmatpush.msra.mxu0 0.0
    %263 = vmatpush.msra.mxu0 0.0
    %264 = vmatpush.msra.mxu0 0.0
    %265 = vmatpush.msra.mxu0 0.0
    %266 = vmatpush.msra.mxu0 0.0
    %267 = vmatpush.msra.mxu0 0.0
    %268 = vmatpush.msra.mxu0 0.0
    %269 = vmatpush.msra.mxu0 0.0
    %270 = vmatpush.msra.mxu0 0.0
    %271 = vmatpush.msra.mxu0 %v64
    %272 = vmatpush.msra.mxu0 %v52
    %273 = vmatpush.msra.mxu0 %v40
    %274 = vmatpush.msra.mxu0 %v28
    %275 = vmatmul.f32.gmra.mxu0 %v70
    %v276 = vpop.f32.mrf.mxu0
    %v277 = vadd.f32 0.0, %v276
    %278 = vmatmul.f32.gmra.mxu0 %v73
    %v279 = vpop.f32.mrf.mxu0
    %v280 = vadd.f32 0.0, %v279
    %281 = vdwg.mxu0
    %282 = vmatpush.msra.mxu0 0.0
    %283 = vmatpush.msra.mxu0 0.0
    %284 = vmatpush.msra.mxu0 0.0
    %285 = vmatpush.msra.mxu0 0.0
    %286 = vmatpush.msra.mxu0 0.0
    %287 = vmatpush.msra.mxu0 0.0
    %288 = vmatpush.msra.mxu0 0.0
    %289 = vmatpush.msra.mxu0 0.0
    %290 = vmatpush.msra.mxu0 0.0
    %291 = vmatpush.msra.mxu0 0.0
    %292 = vmatpush.msra.mxu0 0.0
    %293 = vmatpush.msra.mxu0 0.0
    %294 = vmatpush.msra.mxu0 %v65
    %295 = vmatpush.msra.mxu0 %v53
    %296 = vmatpush.msra.mxu0 %v41
    %297 = vmatpush.msra.mxu0 %v29
    %298 = vmatmul.f32.gmra.mxu0 %v70
    %v299 = vpop.f32.mrf.mxu0
    %v300 = vadd.f32 0.0, %v299
    %301 = vmatmul.f32.gmra.mxu0 %v73
    %v302 = vpop.f32.mrf.mxu0
    %v303 = vadd.f32 0.0, %v302
    %304 = vdwg.mxu0
    %305 = vmatpush.msra.mxu0 0.0
    %306 = vmatpush.msra.mxu0 0.0
    %307 = vmatpush.msra.mxu0 0.0
    %308 = vmatpush.msra.mxu0 0.0
    %309 = vmatpush.msra.mxu0 0.0
    %310 = vmatpush.msra.mxu0 0.0
    %311 = vmatpush.msra.mxu0 0.0
    %312 = vmatpush.msra.mxu0 0.0
    %313 = vmatpush.msra.mxu0 0.0
    %314 = vmatpush.msra.mxu0 0.0
    %315 = vmatpush.msra.mxu0 0.0
    %316 = vmatpush.msra.mxu0 0.0
    %317 = vmatpush.msra.mxu0 %v66
    %318 = vmatpush.msra.mxu0 %v54
    %319 = vmatpush.msra.mxu0 %v42
    %320 = vmatpush.msra.mxu0 %v30
    %321 = vmatmul.f32.gmra.mxu0 %v70
    %v322 = vpop.f32.mrf.mxu0
    %v323 = vadd.f32 0.0, %v322
    %324 = vmatmul.f32.gmra.mxu0 %v73
    %v325 = vpop.f32.mrf.mxu0
    %v326 = vadd.f32 0.0, %v325
    %327 = vdwg.mxu0
    %328 = vmatpush.msra.mxu0 0.0
    %329 = vmatpush.msra.mxu0 0.0
    %330 = vmatpush.msra.mxu0 0.0
    %331 = vmatpush.msra.mxu0 0.0
    %332 = vmatpush.msra.mxu0 0.0
    %333 = vmatpush.msra.mxu0 0.0
    %334 = vmatpush.msra.mxu0 0.0
    %335 = vmatpush.msra.mxu0 0.0
    %336 = vmatpush.msra.mxu0 0.0
    %337 = vmatpush.msra.mxu0 0.0
    %338 = vmatpush.msra.mxu0 0.0
    %339 = vmatpush.msra.mxu0 0.0
    %340 = vmatpush.msra.mxu0 %v67
    %341 = vmatpush.msra.mxu0 %v55
    %342 = vmatpush.msra.mxu0 %v43
    %343 = vmatpush.msra.mxu0 %v31
    %344 = vmatmul.f32.gmra.mxu0 %v70
    %v345 = vpop.f32.mrf.mxu0
    %v346 = vadd.f32 0.0, %v345
    %347 = vmatmul.f32.gmra.mxu0 %v73
    %v348 = vpop.f32.mrf.mxu0
    %v349 = vadd.f32 0.0, %v348
    %350 = vdwg.mxu0
    %vm351 = vcmask 523264
    %v353 = vsel %vm351, %v93, 0
    %v356 = vsel %vm351, %v185, 0
    %358 = vmatpush.xpose.msra.mxu0 0.0
    %359 = vmatpush.xpose.msra.mxu0 0.0
    %360 = vmatpush.xpose.msra.mxu0 0.0
    %361 = vmatpush.xpose.msra.mxu0 0.0
    %362 = vmatpush.xpose.msra.mxu0 0.0
    %363 = vmatpush.xpose.msra.mxu0 0.0
    %364 = vmatpush.xpose.msra.mxu0 0.0
    %365 = vmatpush.xpose.msra.mxu0 0.0
    %366 = vmatpush.xpose.msra.mxu0 0.0
    %367 = vmatpush.xpose.msra.mxu0 0.0
    %368 = vmatpush.xpose.msra.mxu0 0.0
    %369 = vmatpush.xpose.msra.mxu0 0.0
    %370 = vmatpush.xpose.msra.mxu0 0.0
    %371 = vmatpush.xpose.msra.mxu0 0.0
    %372 = vmatpush.xpose.msra.mxu0 0.0
    %373 = vmatpush.xpose.msra.mxu0 %v356
    %374 = vmatmul.f32.gmra.mxu0 %v353
    %v375 = vpop.f32.mrf.mxu0
    %v376 = vadd.f32 0.0, %v375
    %377 = vdwg.mxu0
    %v379 = vsel %vm351, %v96, 0
    %v382 = vsel %vm351, %v188, 0
    %384 = vmatpush.xpose.msra.mxu0 0.0
    %385 = vmatpush.xpose.msra.mxu0 0.0
    %386 = vmatpush.xpose.msra.mxu0 0.0
    %387 = vmatpush.xpose.msra.mxu0 0.0
    %388 = vmatpush.xpose.msra.mxu0 0.0
    %389 = vmatpush.xpose.msra.mxu0 0.0
    %390 = vmatpush.xpose.msra.mxu0 0.0
    %391 = vmatpush.xpose.msra.mxu0 0.0
    %392 = vmatpush.xpose.msra.mxu0 0.0
    %393 = vmatpush.xpose.msra.mxu0 0.0
    %394 = vmatpush.xpose.msra.mxu0 0.0
    %395 = vmatpush.xpose.msra.mxu0 0.0
    %396 = vmatpush.xpose.msra.mxu0 0.0
    %397 = vmatpush.xpose.msra.mxu0 0.0
    %398 = vmatpush.xpose.msra.mxu0 0.0
    %399 = vmatpush.xpose.msra.mxu0 %v382
    %400 = vmatmul.f32.gmra.mxu0 %v379
    %v401 = vpop.f32.mrf.mxu0
    %v402 = vadd.f32 0.0, %v401
    %403 = vdwg.mxu0
    %vm404 = vcmask 64512
    %v405 = vsel %vm404, %v376, -inf
    %406 = vmax.xlane.f32.xlu0 %v405
    %v407 = vpop.xlane.xlu0 %406
    %v408 = vsel %vm404, %v402, -inf
    %409 = vmax.xlane.f32.xlu0 %v408
    %v410 = vpop.xlane.xlu0 %409
    %v411 = vsub.f32 %v376, %v407
    %v412 = vsub.f32 %v402, %v410
    %v413 = vmul.f32 %v411, 1.442695
    %v414 = vpow.pop %v413
    %v415 = vmul.f32 %v412, 1.442695
    %v416 = vpow.pop %v415
    %v417 = vsel %vm404, %v414, 0.0
    %418 = vadd.xlane.f32.xlu0 %v417
    %v419 = vpop.xlane.xlu0 %418
    %v420 = vsel %vm404, %v416, 0.0
    %421 = vadd.xlane.f32.xlu0 %v420
    %v422 = vpop.xlane.xlu0 %421
    %v423 = vrcp.pop %v419
    %v424 = vrcp.pop %v422
    %v425 = vmul.f32 %v414, %v423
    %v426 = vmul.f32 %v416, %v424
    %v428 = vsel %vm404, %v425, 0
    %430 = vmatpush.msra.mxu0 0.0
    %431 = vmatpush.msra.mxu0 0.0
    %432 = vmatpush.msra.mxu0 0.0
    %433 = vmatpush.msra.mxu0 0.0
    %434 = vmatpush.msra.mxu0 0.0
    %435 = vmatpush.msra.mxu0 0.0
    %436 = vmatpush.msra.mxu0 0.0
    %437 = vmatpush.msra.mxu0 0.0
    %438 = vmatpush.msra.mxu0 0.0
    %439 = vmatpush.msra.mxu0 0.0
    %440 = vmatpush.msra.mxu0 0.0
    %441 = vmatpush.msra.mxu0 0.0
    %442 = vmatpush.msra.mxu0 0.0
    %443 = vmatpush.msra.mxu0 0.0
    %444 = vmatpush.msra.mxu0 0.0
    %445 = vmatpush.msra.mxu0 %v277
    %446 = vmatmul.f32.gmra.mxu0 %v428
    %v447 = vpop.f32.mrf.mxu0
    %v448 = vadd.f32 0.0, %v447
    %449 = vdwg.mxu0
    %v451 = vsel %vm404, %v426, 0
    %453 = vmatpush.msra.mxu0 0.0
    %454 = vmatpush.msra.mxu0 0.0
    %455 = vmatpush.msra.mxu0 0.0
    %456 = vmatpush.msra.mxu0 0.0
    %457 = vmatpush.msra.mxu0 0.0
    %458 = vmatpush.msra.mxu0 0.0
    %459 = vmatpush.msra.mxu0 0.0
    %460 = vmatpush.msra.mxu0 0.0
    %461 = vmatpush.msra.mxu0 0.0
    %462 = vmatpush.msra.mxu0 0.0
    %463 = vmatpush.msra.mxu0 0.0
    %464 = vmatpush.msra.mxu0 0.0
    %465 = vmatpush.msra.mxu0 0.0
    %466 = vmatpush.msra.mxu0 0.0
    %467 = vmatpush.msra.mxu0 0.0
    %468 = vmatpush.msra.mxu0 %v280
    %469 = vmatmul.f32.gmra.mxu0 %v451
    %v470 = vpop.f32.mrf.mxu0
    %v471 = vadd.f32 0.0, %v470
    %472 = vdwg.mxu0
    %473 = vrot.lane.b32.xlu0 %v93, 64
    %v474 = vpop.permute.xlu0 %473
    %475 = vrot.lane.b32.xlu0 %v185, 64
    %v476 = vpop.permute.xlu0 %475
    %v477 = vsel %vm351, %v474, 0
    %v479 = vsel %vm351, %v476, 0
    %481 = vmatpush.xpose.msra.mxu0 0.0
    %482 = vmatpush.xpose.msra.mxu0 0.0
    %483 = vmatpush.xpose.msra.mxu0 0.0
    %484 = vmatpush.xpose.msra.mxu0 0.0
    %485 = vmatpush.xpose.msra.mxu0 0.0
    %486 = vmatpush.xpose.msra.mxu0 0.0
    %487 = vmatpush.xpose.msra.mxu0 0.0
    %488 = vmatpush.xpose.msra.mxu0 0.0
    %489 = vmatpush.xpose.msra.mxu0 0.0
    %490 = vmatpush.xpose.msra.mxu0 0.0
    %491 = vmatpush.xpose.msra.mxu0 0.0
    %492 = vmatpush.xpose.msra.mxu0 0.0
    %493 = vmatpush.xpose.msra.mxu0 0.0
    %494 = vmatpush.xpose.msra.mxu0 0.0
    %495 = vmatpush.xpose.msra.mxu0 0.0
    %496 = vmatpush.xpose.msra.mxu0 %v479
    %497 = vmatmul.f32.gmra.mxu0 %v477
    %v498 = vpop.f32.mrf.mxu0
    %v499 = vadd.f32 0.0, %v498
    %500 = vdwg.mxu0
    %501 = vrot.lane.b32.xlu0 %v96, 64
    %v502 = vpop.permute.xlu0 %501
    %503 = vrot.lane.b32.xlu0 %v188, 64
    %v504 = vpop.permute.xlu0 %503
    %v505 = vsel %vm351, %v502, 0
    %v507 = vsel %vm351, %v504, 0
    %509 = vmatpush.xpose.msra.mxu0 0.0
    %510 = vmatpush.xpose.msra.mxu0 0.0
    %511 = vmatpush.xpose.msra.mxu0 0.0
    %512 = vmatpush.xpose.msra.mxu0 0.0
    %513 = vmatpush.xpose.msra.mxu0 0.0
    %514 = vmatpush.xpose.msra.mxu0 0.0
    %515 = vmatpush.xpose.msra.mxu0 0.0
    %516 = vmatpush.xpose.msra.mxu0 0.0
    %517 = vmatpush.xpose.msra.mxu0 0.0
    %518 = vmatpush.xpose.msra.mxu0 0.0
    %519 = vmatpush.xpose.msra.mxu0 0.0
    %520 = vmatpush.xpose.msra.mxu0 0.0
    %521 = vmatpush.xpose.msra.mxu0 0.0
    %522 = vmatpush.xpose.msra.mxu0 0.0
    %523 = vmatpush.xpose.msra.mxu0 0.0
    %524 = vmatpush.xpose.msra.mxu0 %v507
    %525 = vmatmul.f32.gmra.mxu0 %v505
    %v526 = vpop.f32.mrf.mxu0
    %v527 = vadd.f32 0.0, %v526
    %528 = vdwg.mxu0
    %v529 = vsel %vm404, %v499, -inf
    %530 = vmax.xlane.f32.xlu0 %v529
    %v531 = vpop.xlane.xlu0 %530
    %v532 = vsel %vm404, %v527, -inf
    %533 = vmax.xlane.f32.xlu0 %v532
    %v534 = vpop.xlane.xlu0 %533
    %v535 = vsub.f32 %v499, %v531
    %v536 = vsub.f32 %v527, %v534
    %v537 = vmul.f32 %v535, 1.442695
    %v538 = vpow.pop %v537
    %v539 = vmul.f32 %v536, 1.442695
    %v540 = vpow.pop %v539
    %v541 = vsel %vm404, %v538, 0.0
    %542 = vadd.xlane.f32.xlu0 %v541
    %v543 = vpop.xlane.xlu0 %542
    %v544 = vsel %vm404, %v540, 0.0
    %545 = vadd.xlane.f32.xlu0 %v544
    %v546 = vpop.xlane.xlu0 %545
    %v547 = vrcp.pop %v543
    %v548 = vrcp.pop %v546
    %v549 = vmul.f32 %v538, %v547
    %v550 = vmul.f32 %v540, %v548
    %552 = vrot.lane.b32.xlu0 %v277, 64
    %v553 = vpop.permute.xlu0 %552
    %v556 = vsel %vm404, %v549, 0
    %558 = vmatpush.msra.mxu0 0.0
    %559 = vmatpush.msra.mxu0 0.0
    %560 = vmatpush.msra.mxu0 0.0
    %561 = vmatpush.msra.mxu0 0.0
    %562 = vmatpush.msra.mxu0 0.0
    %563 = vmatpush.msra.mxu0 0.0
    %564 = vmatpush.msra.mxu0 0.0
    %565 = vmatpush.msra.mxu0 0.0
    %566 = vmatpush.msra.mxu0 0.0
    %567 = vmatpush.msra.mxu0 0.0
    %568 = vmatpush.msra.mxu0 0.0
    %569 = vmatpush.msra.mxu0 0.0
    %570 = vmatpush.msra.mxu0 0.0
    %571 = vmatpush.msra.mxu0 0.0
    %572 = vmatpush.msra.mxu0 0.0
    %573 = vmatpush.msra.mxu0 %v553
    %574 = vmatmul.f32.gmra.mxu0 %v556
    %v575 = vpop.f32.mrf.mxu0
    %v576 = vadd.f32 0.0, %v575
    %577 = vdwg.mxu0
    %579 = vrot.lane.b32.xlu0 %v280, 64
    %v580 = vpop.permute.xlu0 %579
    %v583 = vsel %vm404, %v550, 0
    %585 = vmatpush.msra.mxu0 0.0
    %586 = vmatpush.msra.mxu0 0.0
    %587 = vmatpush.msra.mxu0 0.0
    %588 = vmatpush.msra.mxu0 0.0
    %589 = vmatpush.msra.mxu0 0.0
    %590 = vmatpush.msra.mxu0 0.0
    %591 = vmatpush.msra.mxu0 0.0
    %592 = vmatpush.msra.mxu0 0.0
    %593 = vmatpush.msra.mxu0 0.0
    %594 = vmatpush.msra.mxu0 0.0
    %595 = vmatpush.msra.mxu0 0.0
    %596 = vmatpush.msra.mxu0 0.0
    %597 = vmatpush.msra.mxu0 0.0
    %598 = vmatpush.msra.mxu0 0.0
    %599 = vmatpush.msra.mxu0 0.0
    %600 = vmatpush.msra.mxu0 %v580
    %601 = vmatmul.f32.gmra.mxu0 %v583
    %v602 = vpop.f32.mrf.mxu0
    %v603 = vadd.f32 0.0, %v602
    %604 = vdwg.mxu0
    %v606 = vsel %vm351, %v116, 0
    %v609 = vsel %vm351, %v208, 0
    %611 = vmatpush.xpose.msra.mxu0 0.0
    %612 = vmatpush.xpose.msra.mxu0 0.0
    %613 = vmatpush.xpose.msra.mxu0 0.0
    %614 = vmatpush.xpose.msra.mxu0 0.0
    %615 = vmatpush.xpose.msra.mxu0 0.0
    %616 = vmatpush.xpose.msra.mxu0 0.0
    %617 = vmatpush.xpose.msra.mxu0 0.0
    %618 = vmatpush.xpose.msra.mxu0 0.0
    %619 = vmatpush.xpose.msra.mxu0 0.0
    %620 = vmatpush.xpose.msra.mxu0 0.0
    %621 = vmatpush.xpose.msra.mxu0 0.0
    %622 = vmatpush.xpose.msra.mxu0 0.0
    %623 = vmatpush.xpose.msra.mxu0 0.0
    %624 = vmatpush.xpose.msra.mxu0 0.0
    %625 = vmatpush.xpose.msra.mxu0 0.0
    %626 = vmatpush.xpose.msra.mxu0 %v609
    %627 = vmatmul.f32.gmra.mxu0 %v606
    %v628 = vpop.f32.mrf.mxu0
    %v629 = vadd.f32 0.0, %v628
    %630 = vdwg.mxu0
    %v632 = vsel %vm351, %v119, 0
    %v635 = vsel %vm351, %v211, 0
    %637 = vmatpush.xpose.msra.mxu0 0.0
    %638 = vmatpush.xpose.msra.mxu0 0.0
    %639 = vmatpush.xpose.msra.mxu0 0.0
    %640 = vmatpush.xpose.msra.mxu0 0.0
    %641 = vmatpush.xpose.msra.mxu0 0.0
    %642 = vmatpush.xpose.msra.mxu0 0.0
    %643 = vmatpush.xpose.msra.mxu0 0.0
    %644 = vmatpush.xpose.msra.mxu0 0.0
    %645 = vmatpush.xpose.msra.mxu0 0.0
    %646 = vmatpush.xpose.msra.mxu0 0.0
    %647 = vmatpush.xpose.msra.mxu0 0.0
    %648 = vmatpush.xpose.msra.mxu0 0.0
    %649 = vmatpush.xpose.msra.mxu0 0.0
    %650 = vmatpush.xpose.msra.mxu0 0.0
    %651 = vmatpush.xpose.msra.mxu0 0.0
    %652 = vmatpush.xpose.msra.mxu0 %v635
    %653 = vmatmul.f32.gmra.mxu0 %v632
    %v654 = vpop.f32.mrf.mxu0
    %v655 = vadd.f32 0.0, %v654
    %656 = vdwg.mxu0
    %v657 = vsel %vm404, %v629, -inf
    %658 = vmax.xlane.f32.xlu0 %v657
    %v659 = vpop.xlane.xlu0 %658
    %v660 = vsel %vm404, %v655, -inf
    %661 = vmax.xlane.f32.xlu0 %v660
    %v662 = vpop.xlane.xlu0 %661
    %v663 = vsub.f32 %v629, %v659
    %v664 = vsub.f32 %v655, %v662
    %v665 = vmul.f32 %v663, 1.442695
    %v666 = vpow.pop %v665
    %v667 = vmul.f32 %v664, 1.442695
    %v668 = vpow.pop %v667
    %v669 = vsel %vm404, %v666, 0.0
    %670 = vadd.xlane.f32.xlu0 %v669
    %v671 = vpop.xlane.xlu0 %670
    %v672 = vsel %vm404, %v668, 0.0
    %673 = vadd.xlane.f32.xlu0 %v672
    %v674 = vpop.xlane.xlu0 %673
    %v675 = vrcp.pop %v671
    %v676 = vrcp.pop %v674
    %v677 = vmul.f32 %v666, %v675
    %v678 = vmul.f32 %v668, %v676
    %v680 = vsel %vm404, %v677, 0
    %682 = vmatpush.msra.mxu0 0.0
    %683 = vmatpush.msra.mxu0 0.0
    %684 = vmatpush.msra.mxu0 0.0
    %685 = vmatpush.msra.mxu0 0.0
    %686 = vmatpush.msra.mxu0 0.0
    %687 = vmatpush.msra.mxu0 0.0
    %688 = vmatpush.msra.mxu0 0.0
    %689 = vmatpush.msra.mxu0 0.0
    %690 = vmatpush.msra.mxu0 0.0
    %691 = vmatpush.msra.mxu0 0.0
    %692 = vmatpush.msra.mxu0 0.0
    %693 = vmatpush.msra.mxu0 0.0
    %694 = vmatpush.msra.mxu0 0.0
    %695 = vmatpush.msra.mxu0 0.0
    %696 = vmatpush.msra.mxu0 0.0
    %697 = vmatpush.msra.mxu0 %v300
    %698 = vmatmul.f32.gmra.mxu0 %v680
    %v699 = vpop.f32.mrf.mxu0
    %v700 = vadd.f32 0.0, %v699
    %701 = vdwg.mxu0
    %v703 = vsel %vm404, %v678, 0
    %705 = vmatpush.msra.mxu0 0.0
    %706 = vmatpush.msra.mxu0 0.0
    %707 = vmatpush.msra.mxu0 0.0
    %708 = vmatpush.msra.mxu0 0.0
    %709 = vmatpush.msra.mxu0 0.0
    %710 = vmatpush.msra.mxu0 0.0
    %711 = vmatpush.msra.mxu0 0.0
    %712 = vmatpush.msra.mxu0 0.0
    %713 = vmatpush.msra.mxu0 0.0
    %714 = vmatpush.msra.mxu0 0.0
    %715 = vmatpush.msra.mxu0 0.0
    %716 = vmatpush.msra.mxu0 0.0
    %717 = vmatpush.msra.mxu0 0.0
    %718 = vmatpush.msra.mxu0 0.0
    %719 = vmatpush.msra.mxu0 0.0
    %720 = vmatpush.msra.mxu0 %v303
    %721 = vmatmul.f32.gmra.mxu0 %v703
    %v722 = vpop.f32.mrf.mxu0
    %v723 = vadd.f32 0.0, %v722
    %724 = vdwg.mxu0
    %725 = vrot.lane.b32.xlu0 %v116, 64
    %v726 = vpop.permute.xlu0 %725
    %727 = vrot.lane.b32.xlu0 %v208, 64
    %v728 = vpop.permute.xlu0 %727
    %v729 = vsel %vm351, %v726, 0
    %v731 = vsel %vm351, %v728, 0
    %733 = vmatpush.xpose.msra.mxu0 0.0
    %734 = vmatpush.xpose.msra.mxu0 0.0
    %735 = vmatpush.xpose.msra.mxu0 0.0
    %736 = vmatpush.xpose.msra.mxu0 0.0
    %737 = vmatpush.xpose.msra.mxu0 0.0
    %738 = vmatpush.xpose.msra.mxu0 0.0
    %739 = vmatpush.xpose.msra.mxu0 0.0
    %740 = vmatpush.xpose.msra.mxu0 0.0
    %741 = vmatpush.xpose.msra.mxu0 0.0
    %742 = vmatpush.xpose.msra.mxu0 0.0
    %743 = vmatpush.xpose.msra.mxu0 0.0
    %744 = vmatpush.xpose.msra.mxu0 0.0
    %745 = vmatpush.xpose.msra.mxu0 0.0
    %746 = vmatpush.xpose.msra.mxu0 0.0
    %747 = vmatpush.xpose.msra.mxu0 0.0
    %748 = vmatpush.xpose.msra.mxu0 %v731
    %749 = vmatmul.f32.gmra.mxu0 %v729
    %v750 = vpop.f32.mrf.mxu0
    %v751 = vadd.f32 0.0, %v750
    %752 = vdwg.mxu0
    %753 = vrot.lane.b32.xlu0 %v119, 64
    %v754 = vpop.permute.xlu0 %753
    %755 = vrot.lane.b32.xlu0 %v211, 64
    %v756 = vpop.permute.xlu0 %755
    %v757 = vsel %vm351, %v754, 0
    %v759 = vsel %vm351, %v756, 0
    %761 = vmatpush.xpose.msra.mxu0 0.0
    %762 = vmatpush.xpose.msra.mxu0 0.0
    %763 = vmatpush.xpose.msra.mxu0 0.0
    %764 = vmatpush.xpose.msra.mxu0 0.0
    %765 = vmatpush.xpose.msra.mxu0 0.0
    %766 = vmatpush.xpose.msra.mxu0 0.0
    %767 = vmatpush.xpose.msra.mxu0 0.0
    %768 = vmatpush.xpose.msra.mxu0 0.0
    %769 = vmatpush.xpose.msra.mxu0 0.0
    %770 = vmatpush.xpose.msra.mxu0 0.0
    %771 = vmatpush.xpose.msra.mxu0 0.0
    %772 = vmatpush.xpose.msra.mxu0 0.0
    %773 = vmatpush.xpose.msra.mxu0 0.0
    %774 = vmatpush.xpose.msra.mxu0 0.0
    %775 = vmatpush.xpose.msra.mxu0 0.0
    %776 = vmatpush.xpose.msra.mxu0 %v759
    %777 = vmatmul.f32.gmra.mxu0 %v757
    %v778 = vpop.f32.mrf.mxu0
    %v779 = vadd.f32 0.0, %v778
    %780 = vdwg.mxu0
    %v781 = vsel %vm404, %v751, -inf
    %782 = vmax.xlane.f32.xlu0 %v781
    %v783 = vpop.xlane.xlu0 %782
    %v784 = vsel %vm404, %v779, -inf
    %785 = vmax.xlane.f32.xlu0 %v784
    %v786 = vpop.xlane.xlu0 %785
    %v787 = vsub.f32 %v751, %v783
    %v788 = vsub.f32 %v779, %v786
    %v789 = vmul.f32 %v787, 1.442695
    %v790 = vpow.pop %v789
    %v791 = vmul.f32 %v788, 1.442695
    %v792 = vpow.pop %v791
    %v793 = vsel %vm404, %v790, 0.0
    %794 = vadd.xlane.f32.xlu0 %v793
    %v795 = vpop.xlane.xlu0 %794
    %v796 = vsel %vm404, %v792, 0.0
    %797 = vadd.xlane.f32.xlu0 %v796
    %v798 = vpop.xlane.xlu0 %797
    %v799 = vrcp.pop %v795
    %v800 = vrcp.pop %v798
    %v801 = vmul.f32 %v790, %v799
    %v802 = vmul.f32 %v792, %v800
    %804 = vrot.lane.b32.xlu0 %v300, 64
    %v805 = vpop.permute.xlu0 %804
    %v808 = vsel %vm404, %v801, 0
    %810 = vmatpush.msra.mxu0 0.0
    %811 = vmatpush.msra.mxu0 0.0
    %812 = vmatpush.msra.mxu0 0.0
    %813 = vmatpush.msra.mxu0 0.0
    %814 = vmatpush.msra.mxu0 0.0
    %815 = vmatpush.msra.mxu0 0.0
    %816 = vmatpush.msra.mxu0 0.0
    %817 = vmatpush.msra.mxu0 0.0
    %818 = vmatpush.msra.mxu0 0.0
    %819 = vmatpush.msra.mxu0 0.0
    %820 = vmatpush.msra.mxu0 0.0
    %821 = vmatpush.msra.mxu0 0.0
    %822 = vmatpush.msra.mxu0 0.0
    %823 = vmatpush.msra.mxu0 0.0
    %824 = vmatpush.msra.mxu0 0.0
    %825 = vmatpush.msra.mxu0 %v805
    %826 = vmatmul.f32.gmra.mxu0 %v808
    %v827 = vpop.f32.mrf.mxu0
    %v828 = vadd.f32 0.0, %v827
    %829 = vdwg.mxu0
    %831 = vrot.lane.b32.xlu0 %v303, 64
    %v832 = vpop.permute.xlu0 %831
    %v835 = vsel %vm404, %v802, 0
    %837 = vmatpush.msra.mxu0 0.0
    %838 = vmatpush.msra.mxu0 0.0
    %839 = vmatpush.msra.mxu0 0.0
    %840 = vmatpush.msra.mxu0 0.0
    %841 = vmatpush.msra.mxu0 0.0
    %842 = vmatpush.msra.mxu0 0.0
    %843 = vmatpush.msra.mxu0 0.0
    %844 = vmatpush.msra.mxu0 0.0
    %845 = vmatpush.msra.mxu0 0.0
    %846 = vmatpush.msra.mxu0 0.0
    %847 = vmatpush.msra.mxu0 0.0
    %848 = vmatpush.msra.mxu0 0.0
    %849 = vmatpush.msra.mxu0 0.0
    %850 = vmatpush.msra.mxu0 0.0
    %851 = vmatpush.msra.mxu0 0.0
    %852 = vmatpush.msra.mxu0 %v832
    %853 = vmatmul.f32.gmra.mxu0 %v835
    %v854 = vpop.f32.mrf.mxu0
    %v855 = vadd.f32 0.0, %v854
    %856 = vdwg.mxu0
    %v858 = vsel %vm351, %v139, 0
    %v861 = vsel %vm351, %v231, 0
    %863 = vmatpush.xpose.msra.mxu0 0.0
    %864 = vmatpush.xpose.msra.mxu0 0.0
    %865 = vmatpush.xpose.msra.mxu0 0.0
    %866 = vmatpush.xpose.msra.mxu0 0.0
    %867 = vmatpush.xpose.msra.mxu0 0.0
    %868 = vmatpush.xpose.msra.mxu0 0.0
    %869 = vmatpush.xpose.msra.mxu0 0.0
    %870 = vmatpush.xpose.msra.mxu0 0.0
    %871 = vmatpush.xpose.msra.mxu0 0.0
    %872 = vmatpush.xpose.msra.mxu0 0.0
    %873 = vmatpush.xpose.msra.mxu0 0.0
    %874 = vmatpush.xpose.msra.mxu0 0.0
    %875 = vmatpush.xpose.msra.mxu0 0.0
    %876 = vmatpush.xpose.msra.mxu0 0.0
    %877 = vmatpush.xpose.msra.mxu0 0.0
    %878 = vmatpush.xpose.msra.mxu0 %v861
    %879 = vmatmul.f32.gmra.mxu0 %v858
    %v880 = vpop.f32.mrf.mxu0
    %v881 = vadd.f32 0.0, %v880
    %882 = vdwg.mxu0
    %v884 = vsel %vm351, %v142, 0
    %v887 = vsel %vm351, %v234, 0
    %889 = vmatpush.xpose.msra.mxu0 0.0
    %890 = vmatpush.xpose.msra.mxu0 0.0
    %891 = vmatpush.xpose.msra.mxu0 0.0
    %892 = vmatpush.xpose.msra.mxu0 0.0
    %893 = vmatpush.xpose.msra.mxu0 0.0
    %894 = vmatpush.xpose.msra.mxu0 0.0
    %895 = vmatpush.xpose.msra.mxu0 0.0
    %896 = vmatpush.xpose.msra.mxu0 0.0
    %897 = vmatpush.xpose.msra.mxu0 0.0
    %898 = vmatpush.xpose.msra.mxu0 0.0
    %899 = vmatpush.xpose.msra.mxu0 0.0
    %900 = vmatpush.xpose.msra.mxu0 0.0
    %901 = vmatpush.xpose.msra.mxu0 0.0
    %902 = vmatpush.xpose.msra.mxu0 0.0
    %903 = vmatpush.xpose.msra.mxu0 0.0
    %904 = vmatpush.xpose.msra.mxu0 %v887
    %905 = vmatmul.f32.gmra.mxu0 %v884
    %v906 = vpop.f32.mrf.mxu0
    %v907 = vadd.f32 0.0, %v906
    %908 = vdwg.mxu0
    %v909 = vsel %vm404, %v881, -inf
    %910 = vmax.xlane.f32.xlu0 %v909
    %v911 = vpop.xlane.xlu0 %910
    %v912 = vsel %vm404, %v907, -inf
    %913 = vmax.xlane.f32.xlu0 %v912
    %v914 = vpop.xlane.xlu0 %913
    %v915 = vsub.f32 %v881, %v911
    %v916 = vsub.f32 %v907, %v914
    %v917 = vmul.f32 %v915, 1.442695
    %v918 = vpow.pop %v917
    %v919 = vmul.f32 %v916, 1.442695
    %v920 = vpow.pop %v919
    %v921 = vsel %vm404, %v918, 0.0
    %922 = vadd.xlane.f32.xlu0 %v921
    %v923 = vpop.xlane.xlu0 %922
    %v924 = vsel %vm404, %v920, 0.0
    %925 = vadd.xlane.f32.xlu0 %v924
    %v926 = vpop.xlane.xlu0 %925
    %v927 = vrcp.pop %v923
    %v928 = vrcp.pop %v926
    %v929 = vmul.f32 %v918, %v927
    %v930 = vmul.f32 %v920, %v928
    %v932 = vsel %vm404, %v929, 0
    %934 = vmatpush.msra.mxu0 0.0
    %935 = vmatpush.msra.mxu0 0.0
    %936 = vmatpush.msra.mxu0 0.0
    %937 = vmatpush.msra.mxu0 0.0
    %938 = vmatpush.msra.mxu0 0.0
    %939 = vmatpush.msra.mxu0 0.0
    %940 = vmatpush.msra.mxu0 0.0
    %941 = vmatpush.msra.mxu0 0.0
    %942 = vmatpush.msra.mxu0 0.0
    %943 = vmatpush.msra.mxu0 0.0
    %944 = vmatpush.msra.mxu0 0.0
    %945 = vmatpush.msra.mxu0 0.0
    %946 = vmatpush.msra.mxu0 0.0
    %947 = vmatpush.msra.mxu0 0.0
    %948 = vmatpush.msra.mxu0 0.0
    %949 = vmatpush.msra.mxu0 %v323
    %950 = vmatmul.f32.gmra.mxu0 %v932
    %v951 = vpop.f32.mrf.mxu0
    %v952 = vadd.f32 0.0, %v951
    %953 = vdwg.mxu0
    %v955 = vsel %vm404, %v930, 0
    %957 = vmatpush.msra.mxu0 0.0
    %958 = vmatpush.msra.mxu0 0.0
    %959 = vmatpush.msra.mxu0 0.0
    %960 = vmatpush.msra.mxu0 0.0
    %961 = vmatpush.msra.mxu0 0.0
    %962 = vmatpush.msra.mxu0 0.0
    %963 = vmatpush.msra.mxu0 0.0
    %964 = vmatpush.msra.mxu0 0.0
    %965 = vmatpush.msra.mxu0 0.0
    %966 = vmatpush.msra.mxu0 0.0
    %967 = vmatpush.msra.mxu0 0.0
    %968 = vmatpush.msra.mxu0 0.0
    %969 = vmatpush.msra.mxu0 0.0
    %970 = vmatpush.msra.mxu0 0.0
    %971 = vmatpush.msra.mxu0 0.0
    %972 = vmatpush.msra.mxu0 %v326
    %973 = vmatmul.f32.gmra.mxu0 %v955
    %v974 = vpop.f32.mrf.mxu0
    %v975 = vadd.f32 0.0, %v974
    %976 = vdwg.mxu0
    %977 = vrot.lane.b32.xlu0 %v139, 64
    %v978 = vpop.permute.xlu0 %977
    %979 = vrot.lane.b32.xlu0 %v231, 64
    %v980 = vpop.permute.xlu0 %979
    %v981 = vsel %vm351, %v978, 0
    %v983 = vsel %vm351, %v980, 0
    %985 = vmatpush.xpose.msra.mxu0 0.0
    %986 = vmatpush.xpose.msra.mxu0 0.0
    %987 = vmatpush.xpose.msra.mxu0 0.0
    %988 = vmatpush.xpose.msra.mxu0 0.0
    %989 = vmatpush.xpose.msra.mxu0 0.0
    %990 = vmatpush.xpose.msra.mxu0 0.0
    %991 = vmatpush.xpose.msra.mxu0 0.0
    %992 = vmatpush.xpose.msra.mxu0 0.0
    %993 = vmatpush.xpose.msra.mxu0 0.0
    %994 = vmatpush.xpose.msra.mxu0 0.0
    %995 = vmatpush.xpose.msra.mxu0 0.0
    %996 = vmatpush.xpose.msra.mxu0 0.0
    %997 = vmatpush.xpose.msra.mxu0 0.0
    %998 = vmatpush.xpose.msra.mxu0 0.0
    %999 = vmatpush.xpose.msra.mxu0 0.0
    %1000 = vmatpush.xpose.msra.mxu0 %v983
    %1001 = vmatmul.f32.gmra.mxu0 %v981
    %v1002 = vpop.f32.mrf.mxu0
    %v1003 = vadd.f32 0.0, %v1002
    %1004 = vdwg.mxu0
    %1005 = vrot.lane.b32.xlu0 %v142, 64
    %v1006 = vpop.permute.xlu0 %1005
    %1007 = vrot.lane.b32.xlu0 %v234, 64
    %v1008 = vpop.permute.xlu0 %1007
    %v1009 = vsel %vm351, %v1006, 0
    %v1011 = vsel %vm351, %v1008, 0
    %1013 = vmatpush.xpose.msra.mxu0 0.0
    %1014 = vmatpush.xpose.msra.mxu0 0.0
    %1015 = vmatpush.xpose.msra.mxu0 0.0
    %1016 = vmatpush.xpose.msra.mxu0 0.0
    %1017 = vmatpush.xpose.msra.mxu0 0.0
    %1018 = vmatpush.xpose.msra.mxu0 0.0
    %1019 = vmatpush.xpose.msra.mxu0 0.0
    %1020 = vmatpush.xpose.msra.mxu0 0.0
    %1021 = vmatpush.xpose.msra.mxu0 0.0
    %1022 = vmatpush.xpose.msra.mxu0 0.0
    %1023 = vmatpush.xpose.msra.mxu0 0.0
    %1024 = vmatpush.xpose.msra.mxu0 0.0
    %1025 = vmatpush.xpose.msra.mxu0 0.0
    %1026 = vmatpush.xpose.msra.mxu0 0.0
    %1027 = vmatpush.xpose.msra.mxu0 0.0
    %1028 = vmatpush.xpose.msra.mxu0 %v1011
    %1029 = vmatmul.f32.gmra.mxu0 %v1009
    %v1030 = vpop.f32.mrf.mxu0
    %v1031 = vadd.f32 0.0, %v1030
    %1032 = vdwg.mxu0
    %v1033 = vsel %vm404, %v1003, -inf
    %1034 = vmax.xlane.f32.xlu0 %v1033
    %v1035 = vpop.xlane.xlu0 %1034
    %v1036 = vsel %vm404, %v1031, -inf
    %1037 = vmax.xlane.f32.xlu0 %v1036
    %v1038 = vpop.xlane.xlu0 %1037
    %v1039 = vsub.f32 %v1003, %v1035
    %v1040 = vsub.f32 %v1031, %v1038
    %v1041 = vmul.f32 %v1039, 1.442695
    %v1042 = vpow.pop %v1041
    %v1043 = vmul.f32 %v1040, 1.442695
    %v1044 = vpow.pop %v1043
    %v1045 = vsel %vm404, %v1042, 0.0
    %1046 = vadd.xlane.f32.xlu0 %v1045
    %v1047 = vpop.xlane.xlu0 %1046
    %v1048 = vsel %vm404, %v1044, 0.0
    %1049 = vadd.xlane.f32.xlu0 %v1048
    %v1050 = vpop.xlane.xlu0 %1049
    %v1051 = vrcp.pop %v1047
    %v1052 = vrcp.pop %v1050
    %v1053 = vmul.f32 %v1042, %v1051
    %v1054 = vmul.f32 %v1044, %v1052
    %1056 = vrot.lane.b32.xlu0 %v323, 64
    %v1057 = vpop.permute.xlu0 %1056
    %v1060 = vsel %vm404, %v1053, 0
    %1062 = vmatpush.msra.mxu0 0.0
    %1063 = vmatpush.msra.mxu0 0.0
    %1064 = vmatpush.msra.mxu0 0.0
    %1065 = vmatpush.msra.mxu0 0.0
    %1066 = vmatpush.msra.mxu0 0.0
    %1067 = vmatpush.msra.mxu0 0.0
    %1068 = vmatpush.msra.mxu0 0.0
    %1069 = vmatpush.msra.mxu0 0.0
    %1070 = vmatpush.msra.mxu0 0.0
    %1071 = vmatpush.msra.mxu0 0.0
    %1072 = vmatpush.msra.mxu0 0.0
    %1073 = vmatpush.msra.mxu0 0.0
    %1074 = vmatpush.msra.mxu0 0.0
    %1075 = vmatpush.msra.mxu0 0.0
    %1076 = vmatpush.msra.mxu0 0.0
    %1077 = vmatpush.msra.mxu0 %v1057
    %1078 = vmatmul.f32.gmra.mxu0 %v1060
    %v1079 = vpop.f32.mrf.mxu0
    %v1080 = vadd.f32 0.0, %v1079
    %1081 = vdwg.mxu0
    %1083 = vrot.lane.b32.xlu0 %v326, 64
    %v1084 = vpop.permute.xlu0 %1083
    %v1087 = vsel %vm404, %v1054, 0
    %1089 = vmatpush.msra.mxu0 0.0
    %1090 = vmatpush.msra.mxu0 0.0
    %1091 = vmatpush.msra.mxu0 0.0
    %1092 = vmatpush.msra.mxu0 0.0
    %1093 = vmatpush.msra.mxu0 0.0
    %1094 = vmatpush.msra.mxu0 0.0
    %1095 = vmatpush.msra.mxu0 0.0
    %1096 = vmatpush.msra.mxu0 0.0
    %1097 = vmatpush.msra.mxu0 0.0
    %1098 = vmatpush.msra.mxu0 0.0
    %1099 = vmatpush.msra.mxu0 0.0
    %1100 = vmatpush.msra.mxu0 0.0
    %1101 = vmatpush.msra.mxu0 0.0
    %1102 = vmatpush.msra.mxu0 0.0
    %1103 = vmatpush.msra.mxu0 0.0
    %1104 = vmatpush.msra.mxu0 %v1084
    %1105 = vmatmul.f32.gmra.mxu0 %v1087
    %v1106 = vpop.f32.mrf.mxu0
    %v1107 = vadd.f32 0.0, %v1106
    %1108 = vdwg.mxu0
    %v1110 = vsel %vm351, %v162, 0
    %v1113 = vsel %vm351, %v254, 0
    %1115 = vmatpush.xpose.msra.mxu0 0.0
    %1116 = vmatpush.xpose.msra.mxu0 0.0
    %1117 = vmatpush.xpose.msra.mxu0 0.0
    %1118 = vmatpush.xpose.msra.mxu0 0.0
    %1119 = vmatpush.xpose.msra.mxu0 0.0
    %1120 = vmatpush.xpose.msra.mxu0 0.0
    %1121 = vmatpush.xpose.msra.mxu0 0.0
    %1122 = vmatpush.xpose.msra.mxu0 0.0
    %1123 = vmatpush.xpose.msra.mxu0 0.0
    %1124 = vmatpush.xpose.msra.mxu0 0.0
    %1125 = vmatpush.xpose.msra.mxu0 0.0
    %1126 = vmatpush.xpose.msra.mxu0 0.0
    %1127 = vmatpush.xpose.msra.mxu0 0.0
    %1128 = vmatpush.xpose.msra.mxu0 0.0
    %1129 = vmatpush.xpose.msra.mxu0 0.0
    %1130 = vmatpush.xpose.msra.mxu0 %v1113
    %1131 = vmatmul.f32.gmra.mxu0 %v1110
    %v1132 = vpop.f32.mrf.mxu0
    %v1133 = vadd.f32 0.0, %v1132
    %1134 = vdwg.mxu0
    %v1136 = vsel %vm351, %v165, 0
    %v1139 = vsel %vm351, %v257, 0
    %1141 = vmatpush.xpose.msra.mxu0 0.0
    %1142 = vmatpush.xpose.msra.mxu0 0.0
    %1143 = vmatpush.xpose.msra.mxu0 0.0
    %1144 = vmatpush.xpose.msra.mxu0 0.0
    %1145 = vmatpush.xpose.msra.mxu0 0.0
    %1146 = vmatpush.xpose.msra.mxu0 0.0
    %1147 = vmatpush.xpose.msra.mxu0 0.0
    %1148 = vmatpush.xpose.msra.mxu0 0.0
    %1149 = vmatpush.xpose.msra.mxu0 0.0
    %1150 = vmatpush.xpose.msra.mxu0 0.0
    %1151 = vmatpush.xpose.msra.mxu0 0.0
    %1152 = vmatpush.xpose.msra.mxu0 0.0
    %1153 = vmatpush.xpose.msra.mxu0 0.0
    %1154 = vmatpush.xpose.msra.mxu0 0.0
    %1155 = vmatpush.xpose.msra.mxu0 0.0
    %1156 = vmatpush.xpose.msra.mxu0 %v1139
    %1157 = vmatmul.f32.gmra.mxu0 %v1136
    %v1158 = vpop.f32.mrf.mxu0
    %v1159 = vadd.f32 0.0, %v1158
    %1160 = vdwg.mxu0
    %v1161 = vsel %vm404, %v1133, -inf
    %1162 = vmax.xlane.f32.xlu0 %v1161
    %v1163 = vpop.xlane.xlu0 %1162
    %v1164 = vsel %vm404, %v1159, -inf
    %1165 = vmax.xlane.f32.xlu0 %v1164
    %v1166 = vpop.xlane.xlu0 %1165
    %v1167 = vsub.f32 %v1133, %v1163
    %v1168 = vsub.f32 %v1159, %v1166
    %v1169 = vmul.f32 %v1167, 1.442695
    %v1170 = vpow.pop %v1169
    %v1171 = vmul.f32 %v1168, 1.442695
    %v1172 = vpow.pop %v1171
    %v1173 = vsel %vm404, %v1170, 0.0
    %1174 = vadd.xlane.f32.xlu0 %v1173
    %v1175 = vpop.xlane.xlu0 %1174
    %v1176 = vsel %vm404, %v1172, 0.0
    %1177 = vadd.xlane.f32.xlu0 %v1176
    %v1178 = vpop.xlane.xlu0 %1177
    %v1179 = vrcp.pop %v1175
    %v1180 = vrcp.pop %v1178
    %v1181 = vmul.f32 %v1170, %v1179
    %v1182 = vmul.f32 %v1172, %v1180
    %v1184 = vsel %vm404, %v1181, 0
    %1186 = vmatpush.msra.mxu0 0.0
    %1187 = vmatpush.msra.mxu0 0.0
    %1188 = vmatpush.msra.mxu0 0.0
    %1189 = vmatpush.msra.mxu0 0.0
    %1190 = vmatpush.msra.mxu0 0.0
    %1191 = vmatpush.msra.mxu0 0.0
    %1192 = vmatpush.msra.mxu0 0.0
    %1193 = vmatpush.msra.mxu0 0.0
    %1194 = vmatpush.msra.mxu0 0.0
    %1195 = vmatpush.msra.mxu0 0.0
    %1196 = vmatpush.msra.mxu0 0.0
    %1197 = vmatpush.msra.mxu0 0.0
    %1198 = vmatpush.msra.mxu0 0.0
    %1199 = vmatpush.msra.mxu0 0.0
    %1200 = vmatpush.msra.mxu0 0.0
    %1201 = vmatpush.msra.mxu0 %v346
    %1202 = vmatmul.f32.gmra.mxu0 %v1184
    %v1203 = vpop.f32.mrf.mxu0
    %v1204 = vadd.f32 0.0, %v1203
    %1205 = vdwg.mxu0
    %v1207 = vsel %vm404, %v1182, 0
    %1209 = vmatpush.msra.mxu0 0.0
    %1210 = vmatpush.msra.mxu0 0.0
    %1211 = vmatpush.msra.mxu0 0.0
    %1212 = vmatpush.msra.mxu0 0.0
    %1213 = vmatpush.msra.mxu0 0.0
    %1214 = vmatpush.msra.mxu0 0.0
    %1215 = vmatpush.msra.mxu0 0.0
    %1216 = vmatpush.msra.mxu0 0.0
    %1217 = vmatpush.msra.mxu0 0.0
    %1218 = vmatpush.msra.mxu0 0.0
    %1219 = vmatpush.msra.mxu0 0.0
    %1220 = vmatpush.msra.mxu0 0.0
    %1221 = vmatpush.msra.mxu0 0.0
    %1222 = vmatpush.msra.mxu0 0.0
    %1223 = vmatpush.msra.mxu0 0.0
    %1224 = vmatpush.msra.mxu0 %v349
    %1225 = vmatmul.f32.gmra.mxu0 %v1207
    %v1226 = vpop.f32.mrf.mxu0
    %v1227 = vadd.f32 0.0, %v1226
    %1228 = vdwg.mxu0
    %1229 = vrot.lane.b32.xlu0 %v162, 64
    %v1230 = vpop.permute.xlu0 %1229
    %1231 = vrot.lane.b32.xlu0 %v254, 64
    %v1232 = vpop.permute.xlu0 %1231
    %v1233 = vsel %vm351, %v1230, 0
    %v1235 = vsel %vm351, %v1232, 0
    %1237 = vmatpush.xpose.msra.mxu0 0.0
    %1238 = vmatpush.xpose.msra.mxu0 0.0
    %1239 = vmatpush.xpose.msra.mxu0 0.0
    %1240 = vmatpush.xpose.msra.mxu0 0.0
    %1241 = vmatpush.xpose.msra.mxu0 0.0
    %1242 = vmatpush.xpose.msra.mxu0 0.0
    %1243 = vmatpush.xpose.msra.mxu0 0.0
    %1244 = vmatpush.xpose.msra.mxu0 0.0
    %1245 = vmatpush.xpose.msra.mxu0 0.0
    %1246 = vmatpush.xpose.msra.mxu0 0.0
    %1247 = vmatpush.xpose.msra.mxu0 0.0
    %1248 = vmatpush.xpose.msra.mxu0 0.0
    %1249 = vmatpush.xpose.msra.mxu0 0.0
    %1250 = vmatpush.xpose.msra.mxu0 0.0
    %1251 = vmatpush.xpose.msra.mxu0 0.0
    %1252 = vmatpush.xpose.msra.mxu0 %v1235
    %1253 = vmatmul.f32.gmra.mxu0 %v1233
    %v1254 = vpop.f32.mrf.mxu0
    %v1255 = vadd.f32 0.0, %v1254
    %1256 = vdwg.mxu0
    %1257 = vrot.lane.b32.xlu0 %v165, 64
    %v1258 = vpop.permute.xlu0 %1257
    %1259 = vrot.lane.b32.xlu0 %v257, 64
    %v1260 = vpop.permute.xlu0 %1259
    %v1261 = vsel %vm351, %v1258, 0
    %v1263 = vsel %vm351, %v1260, 0
    %1265 = vmatpush.xpose.msra.mxu0 0.0
    %1266 = vmatpush.xpose.msra.mxu0 0.0
    %1267 = vmatpush.xpose.msra.mxu0 0.0
    %1268 = vmatpush.xpose.msra.mxu0 0.0
    %1269 = vmatpush.xpose.msra.mxu0 0.0
    %1270 = vmatpush.xpose.msra.mxu0 0.0
    %1271 = vmatpush.xpose.msra.mxu0 0.0
    %1272 = vmatpush.xpose.msra.mxu0 0.0
    %1273 = vmatpush.xpose.msra.mxu0 0.0
    %1274 = vmatpush.xpose.msra.mxu0 0.0
    %1275 = vmatpush.xpose.msra.mxu0 0.0
    %1276 = vmatpush.xpose.msra.mxu0 0.0
    %1277 = vmatpush.xpose.msra.mxu0 0.0
    %1278 = vmatpush.xpose.msra.mxu0 0.0
    %1279 = vmatpush.xpose.msra.mxu0 0.0
    %1280 = vmatpush.xpose.msra.mxu0 %v1263
    %1281 = vmatmul.f32.gmra.mxu0 %v1261
    %v1282 = vpop.f32.mrf.mxu0
    %v1283 = vadd.f32 0.0, %v1282
    %1284 = vdwg.mxu0
    %v1285 = vsel %vm404, %v1255, -inf
    %1286 = vmax.xlane.f32.xlu0 %v1285
    %v1287 = vpop.xlane.xlu0 %1286
    %v1288 = vsel %vm404, %v1283, -inf
    %1289 = vmax.xlane.f32.xlu0 %v1288
    %v1290 = vpop.xlane.xlu0 %1289
    %v1291 = vsub.f32 %v1255, %v1287
    %v1292 = vsub.f32 %v1283, %v1290
    %v1293 = vmul.f32 %v1291, 1.442695
    %v1294 = vpow.pop %v1293
    %v1295 = vmul.f32 %v1292, 1.442695
    %v1296 = vpow.pop %v1295
    %v1297 = vsel %vm404, %v1294, 0.0
    %1298 = vadd.xlane.f32.xlu0 %v1297
    %v1299 = vpop.xlane.xlu0 %1298
    %v1300 = vsel %vm404, %v1296, 0.0
    %1301 = vadd.xlane.f32.xlu0 %v1300
    %v1302 = vpop.xlane.xlu0 %1301
    %v1303 = vrcp.pop %v1299
    %v1304 = vrcp.pop %v1302
    %v1305 = vmul.f32 %v1294, %v1303
    %v1306 = vmul.f32 %v1296, %v1304
    %1308 = vrot.lane.b32.xlu0 %v346, 64
    %v1309 = vpop.permute.xlu0 %1308
    %v1312 = vsel %vm404, %v1305, 0
    %1314 = vmatpush.msra.mxu0 0.0
    %1315 = vmatpush.msra.mxu0 0.0
    %1316 = vmatpush.msra.mxu0 0.0
    %1317 = vmatpush.msra.mxu0 0.0
    %1318 = vmatpush.msra.mxu0 0.0
    %1319 = vmatpush.msra.mxu0 0.0
    %1320 = vmatpush.msra.mxu0 0.0
    %1321 = vmatpush.msra.mxu0 0.0
    %1322 = vmatpush.msra.mxu0 0.0
    %1323 = vmatpush.msra.mxu0 0.0
    %1324 = vmatpush.msra.mxu0 0.0
    %1325 = vmatpush.msra.mxu0 0.0
    %1326 = vmatpush.msra.mxu0 0.0
    %1327 = vmatpush.msra.mxu0 0.0
    %1328 = vmatpush.msra.mxu0 0.0
    %1329 = vmatpush.msra.mxu0 %v1309
    %1330 = vmatmul.f32.gmra.mxu0 %v1312
    %v1331 = vpop.f32.mrf.mxu0
    %v1332 = vadd.f32 0.0, %v1331
    %1333 = vdwg.mxu0
    %1335 = vrot.lane.b32.xlu0 %v349, 64
    %v1336 = vpop.permute.xlu0 %1335
    %v1339 = vsel %vm404, %v1306, 0
    %1341 = vmatpush.msra.mxu0 0.0
    %1342 = vmatpush.msra.mxu0 0.0
    %1343 = vmatpush.msra.mxu0 0.0
    %1344 = vmatpush.msra.mxu0 0.0
    %1345 = vmatpush.msra.mxu0 0.0
    %1346 = vmatpush.msra.mxu0 0.0
    %1347 = vmatpush.msra.mxu0 0.0
    %1348 = vmatpush.msra.mxu0 0.0
    %1349 = vmatpush.msra.mxu0 0.0
    %1350 = vmatpush.msra.mxu0 0.0
    %1351 = vmatpush.msra.mxu0 0.0
    %1352 = vmatpush.msra.mxu0 0.0
    %1353 = vmatpush.msra.mxu0 0.0
    %1354 = vmatpush.msra.mxu0 0.0
    %1355 = vmatpush.msra.mxu0 0.0
    %1356 = vmatpush.msra.mxu0 %v1336
    %1357 = vmatmul.f32.gmra.mxu0 %v1339
    %v1358 = vpop.f32.mrf.mxu0
    %v1359 = vadd.f32 0.0, %v1358
    %1360 = vdwg.mxu0
    %1363 = vrot.lane.b32.xlu0 %v576, 64
    %v1364 = vpop.permute.xlu0 %1363
    %1365 = vrot.lane.b32.xlu0 %v603, 64
    %v1366 = vpop.permute.xlu0 %1365
    %1371 = vrot.lane.b32.xlu0 %v828, 64
    %v1372 = vpop.permute.xlu0 %1371
    %1373 = vrot.lane.b32.xlu0 %v855, 64
    %v1374 = vpop.permute.xlu0 %1373
    %1379 = vrot.lane.b32.xlu0 %v1080, 64
    %v1380 = vpop.permute.xlu0 %1379
    %1381 = vrot.lane.b32.xlu0 %v1107, 64
    %v1382 = vpop.permute.xlu0 %1381
    %1387 = vrot.lane.b32.xlu0 %v1332, 64
    %v1388 = vpop.permute.xlu0 %1387
    %1389 = vrot.lane.b32.xlu0 %v1359, 64
    %v1390 = vpop.permute.xlu0 %1389
    %v1393 = vsel %vm351, %v448, %v1364
    %v1394 = vsel %vm351, %v471, %v1366
    %v1395 = vsel %vm351, %v700, %v1372
    %v1396 = vsel %vm351, %v723, %v1374
    %v1397 = vsel %vm351, %v952, %v1380
    %v1398 = vsel %vm351, %v975, %v1382
    %v1399 = vsel %vm351, %v1204, %v1388
    %v1400 = vsel %vm351, %v1227, %v1390
    %v1401 = vld [vmem:[%s2] sm:$0xff]
    %v1402 = vld [vmem:[%s2 + $0x8] sm:$0xff]
    %v1403 = vld [vmem:[%s2 + $0x10] sm:$0xff]
    %v1404 = vld [vmem:[%s2 + $0x18] sm:$0xff]
    %v1405 = vld [vmem:[%s2 + $0x20] sm:$0xff]
    %v1406 = vld [vmem:[%s2 + $0x28] sm:$0xff]
    %v1407 = vld [vmem:[%s2 + $0x30] sm:$0xff]
    %v1408 = vld [vmem:[%s2 + $0x38] sm:$0xff]
    %v1409 = vld [vmem:[%s2 + $0x40] sm:$0xff]
    %v1410 = vld [vmem:[%s2 + $0x48] sm:$0xff]
    %v1411 = vld [vmem:[%s2 + $0x50] sm:$0xff]
    %v1412 = vld [vmem:[%s2 + $0x58] sm:$0xff]
    %v1413 = vld [vmem:[%s2 + $0x60] sm:$0xff]
    %v1414 = vld [vmem:[%s2 + $0x68] sm:$0xff]
    %v1415 = vld [vmem:[%s2 + $0x70] sm:$0xff]
    %v1416 = vld [vmem:[%s2 + $0x78] sm:$0xff]
    %v1417 = vld [vmem:[%s2 + $0x80] sm:$0xff]
    %v1418 = vld [vmem:[%s2 + $0x88] sm:$0xff]
    %v1419 = vld [vmem:[%s2 + $0x90] sm:$0xff]
    %v1420 = vld [vmem:[%s2 + $0x98] sm:$0xff]
    %v1421 = vld [vmem:[%s2 + $0xa0] sm:$0xff]
    %v1422 = vld [vmem:[%s2 + $0xa8] sm:$0xff]
    %v1423 = vld [vmem:[%s2 + $0xb0] sm:$0xff]
    %v1424 = vld [vmem:[%s2 + $0xb8] sm:$0xff]
    %v1425 = vld [vmem:[%s2 + $0xc0] sm:$0xff]
    %v1426 = vld [vmem:[%s2 + $0xc8] sm:$0xff]
    %v1427 = vld [vmem:[%s2 + $0xd0] sm:$0xff]
    %v1428 = vld [vmem:[%s2 + $0xd8] sm:$0xff]
    %v1429 = vld [vmem:[%s2 + $0xe0] sm:$0xff]
    %v1430 = vld [vmem:[%s2 + $0xe8] sm:$0xff]
    %v1431 = vld [vmem:[%s2 + $0xf0] sm:$0xff]
    %v1432 = vld [vmem:[%s2 + $0xf8] sm:$0xff]
    %v1433 = vld [vmem:[%s2 + $0x100] sm:$0xff]
    %v1434 = vld [vmem:[%s2 + $0x108] sm:$0xff]
    %v1435 = vld [vmem:[%s2 + $0x110] sm:$0xff]
    %v1436 = vld [vmem:[%s2 + $0x118] sm:$0xff]
    %v1437 = vld [vmem:[%s2 + $0x120] sm:$0xff]
    %v1438 = vld [vmem:[%s2 + $0x128] sm:$0xff]
    %v1439 = vld [vmem:[%s2 + $0x130] sm:$0xff]
    %v1440 = vld [vmem:[%s2 + $0x138] sm:$0xff]
    %v1441 = vld [vmem:[%s2 + $0x140] sm:$0xff]
    %v1442 = vld [vmem:[%s2 + $0x148] sm:$0xff]
    %v1443 = vld [vmem:[%s2 + $0x150] sm:$0xff]
    %v1444 = vld [vmem:[%s2 + $0x158] sm:$0xff]
    %v1445 = vld [vmem:[%s2 + $0x160] sm:$0xff]
    %v1446 = vld [vmem:[%s2 + $0x168] sm:$0xff]
    %v1447 = vld [vmem:[%s2 + $0x170] sm:$0xff]
    %v1448 = vld [vmem:[%s2 + $0x178] sm:$0xff]
    %v1449 = vld [vmem:[%s2 + $0x180] sm:$0xff]
    %v1450 = vld [vmem:[%s2 + $0x188] sm:$0xff]
    %v1451 = vld [vmem:[%s2 + $0x190] sm:$0xff]
    %v1452 = vld [vmem:[%s2 + $0x198] sm:$0xff]
    %v1453 = vld [vmem:[%s2 + $0x1a0] sm:$0xff]
    %v1454 = vld [vmem:[%s2 + $0x1a8] sm:$0xff]
    %v1455 = vld [vmem:[%s2 + $0x1b0] sm:$0xff]
    %v1456 = vld [vmem:[%s2 + $0x1b8] sm:$0xff]
    %v1457 = vld [vmem:[%s2 + $0x1c0] sm:$0xff]
    %v1458 = vld [vmem:[%s2 + $0x1c8] sm:$0xff]
    %v1459 = vld [vmem:[%s2 + $0x1d0] sm:$0xff]
    %v1460 = vld [vmem:[%s2 + $0x1d8] sm:$0xff]
    %v1461 = vld [vmem:[%s2 + $0x1e0] sm:$0xff]
    %v1462 = vld [vmem:[%s2 + $0x1e8] sm:$0xff]
    %v1463 = vld [vmem:[%s2 + $0x1f0] sm:$0xff]
    %v1464 = vld [vmem:[%s2 + $0x1f8] sm:$0xff]
    %v1465 = vld [vmem:[%s3] sm:$0x1]
    %v1467 = vperm.slane %v1465, 0
    %1469 = vmatpush.msra.mxu0 %v1416
    %1470 = vmatpush.msra.mxu0 %v1415
    %1471 = vmatpush.msra.mxu0 %v1414
    %1472 = vmatpush.msra.mxu0 %v1413
    %1473 = vmatpush.msra.mxu0 %v1412
    %1474 = vmatpush.msra.mxu0 %v1411
    %1475 = vmatpush.msra.mxu0 %v1410
    %1476 = vmatpush.msra.mxu0 %v1409
    %1477 = vmatpush.msra.mxu0 %v1408
    %1478 = vmatpush.msra.mxu0 %v1407
    %1479 = vmatpush.msra.mxu0 %v1406
    %1480 = vmatpush.msra.mxu0 %v1405
    %1481 = vmatpush.msra.mxu0 %v1404
    %1482 = vmatpush.msra.mxu0 %v1403
    %1483 = vmatpush.msra.mxu0 %v1402
    %1484 = vmatpush.msra.mxu0 %v1401
    %1485 = vmatmul.f32.gmra.mxu0 %v1393
    %v1486 = vpop.f32.mrf.mxu0
    %v1487 = vadd.f32 %v1467, %v1486
    %1488 = vmatmul.f32.gmra.mxu0 %v1394
    %v1489 = vpop.f32.mrf.mxu0
    %v1490 = vadd.f32 %v1467, %v1489
    %1491 = vdwg.mxu0
    %1492 = vmatpush.msra.mxu0 %v1432
    %1493 = vmatpush.msra.mxu0 %v1431
    %1494 = vmatpush.msra.mxu0 %v1430
    %1495 = vmatpush.msra.mxu0 %v1429
    %1496 = vmatpush.msra.mxu0 %v1428
    %1497 = vmatpush.msra.mxu0 %v1427
    %1498 = vmatpush.msra.mxu0 %v1426
    %1499 = vmatpush.msra.mxu0 %v1425
    %1500 = vmatpush.msra.mxu0 %v1424
    %1501 = vmatpush.msra.mxu0 %v1423
    %1502 = vmatpush.msra.mxu0 %v1422
    %1503 = vmatpush.msra.mxu0 %v1421
    %1504 = vmatpush.msra.mxu0 %v1420
    %1505 = vmatpush.msra.mxu0 %v1419
    %1506 = vmatpush.msra.mxu0 %v1418
    %1507 = vmatpush.msra.mxu0 %v1417
    %1508 = vmatmul.f32.gmra.mxu0 %v1395
    %v1509 = vpop.f32.mrf.mxu0
    %v1510 = vadd.f32 %v1487, %v1509
    %1511 = vmatmul.f32.gmra.mxu0 %v1396
    %v1512 = vpop.f32.mrf.mxu0
    %v1513 = vadd.f32 %v1490, %v1512
    %1514 = vdwg.mxu0
    %1515 = vmatpush.msra.mxu0 %v1448
    %1516 = vmatpush.msra.mxu0 %v1447
    %1517 = vmatpush.msra.mxu0 %v1446
    %1518 = vmatpush.msra.mxu0 %v1445
    %1519 = vmatpush.msra.mxu0 %v1444
    %1520 = vmatpush.msra.mxu0 %v1443
    %1521 = vmatpush.msra.mxu0 %v1442
    %1522 = vmatpush.msra.mxu0 %v1441
    %1523 = vmatpush.msra.mxu0 %v1440
    %1524 = vmatpush.msra.mxu0 %v1439
    %1525 = vmatpush.msra.mxu0 %v1438
    %1526 = vmatpush.msra.mxu0 %v1437
    %1527 = vmatpush.msra.mxu0 %v1436
    %1528 = vmatpush.msra.mxu0 %v1435
    %1529 = vmatpush.msra.mxu0 %v1434
    %1530 = vmatpush.msra.mxu0 %v1433
    %1531 = vmatmul.f32.gmra.mxu0 %v1397
    %v1532 = vpop.f32.mrf.mxu0
    %v1533 = vadd.f32 %v1510, %v1532
    %1534 = vmatmul.f32.gmra.mxu0 %v1398
    %v1535 = vpop.f32.mrf.mxu0
    %v1536 = vadd.f32 %v1513, %v1535
    %1537 = vdwg.mxu0
    %1538 = vmatpush.msra.mxu0 %v1464
    %1539 = vmatpush.msra.mxu0 %v1463
    %1540 = vmatpush.msra.mxu0 %v1462
    %1541 = vmatpush.msra.mxu0 %v1461
    %1542 = vmatpush.msra.mxu0 %v1460
    %1543 = vmatpush.msra.mxu0 %v1459
    %1544 = vmatpush.msra.mxu0 %v1458
    %1545 = vmatpush.msra.mxu0 %v1457
    %1546 = vmatpush.msra.mxu0 %v1456
    %1547 = vmatpush.msra.mxu0 %v1455
    %1548 = vmatpush.msra.mxu0 %v1454
    %1549 = vmatpush.msra.mxu0 %v1453
    %1550 = vmatpush.msra.mxu0 %v1452
    %1551 = vmatpush.msra.mxu0 %v1451
    %1552 = vmatpush.msra.mxu0 %v1450
    %1553 = vmatpush.msra.mxu0 %v1449
    %1554 = vmatmul.f32.gmra.mxu0 %v1399
    %v1555 = vpop.f32.mrf.mxu0
    %v1556 = vadd.f32 %v1533, %v1555
    %1557 = vmatmul.f32.gmra.mxu0 %v1400
    %v1558 = vpop.f32.mrf.mxu0
    %v1559 = vadd.f32 %v1536, %v1558
    %1560 = vdwg.mxu0
    %1561 = vst.msk [vmem:[#allocation2] sm:$0xff] %vm68, %v1556
    %1562 = vst.msk [vmem:[#allocation2 + $0x8] sm:$0xff] %vm68, %v1559
    // Predicated region
    $region18: #{multihead_attention.1} parent=1 // pred_check
      _
    $region19: #{multihead_attention.1} parent=1 // pred_check_branch
      %1564 = sbr.rel (0) target = $region21
    $region20: #{multihead_attention.1} parent=1 // pred_region
      %1566 = vsyncadd [#allocation3], 0
      %s1567 = sshll.u32 [#allocation2], 4
      %s1568 = int_to_ptr.vmem [resolvable:$true] %s1567
      %s1569 = sshll.u32 %s4, 4
      %s1570 = int_to_ptr.hbm [resolvable:$true] %s1569
      %1575 = dma.vmem_to_hbm [thread:$0]  %s1568, 256, %s1570, [#allocation3], 128, 128, 8
    $region21: #{multihead_attention.1} parent=1 // pred_fallthru
      _
    // Predicated region
    $region22: #{multihead_attention.1} parent=1 // pred_check
      _
    $region23: #{multihead_attention.1} parent=1 // pred_check_branch
      %1577 = sbr.rel (0) target = $region25
    $region24: #{multihead_attention.1} parent=1 // pred_region
      %1579 = dma.done [#allocation3], 256
    $region25: #{multihead_attention.1} parent=1 // pred_fallthru
      _
    %1580 = vsyncpa [#allocation3], 1

</llo_original>
